<compile_context>
chip_gen: v6e
topology: v6e:2x2x1
jax: 0.10.0
libtpu: 0.0.40
codegen_flags: <defaults>
</compile_context>

<pallas_src>
import jax
import jax.numpy as jnp
from jax.experimental import pallas as pl
from jax.experimental.pallas import tpu as pltpu


def semantic_alignment_kernel(phr_ref, vis_ref, Ww_ref, Uw_ref, b_ref, ww_ref,
                              aligned_ref, w_ref, e_ref):
    bB, P, Q = phr_ref.shape
    _, T, F = vis_ref.shape
    Bo = Ww_ref.shape[1]

    phr = phr_ref[...]                   # [bB, P, Q]
    vis = vis_ref[...]                   # [bB, T, F]
    Ww = Ww_ref[...]                     # [Q, Bo]
    Uw = Uw_ref[...]                     # [F, Bo]
    bvec = b_ref[...]                    # [1, Bo]
    wrow = ww_ref[...]                   # [1, Bo]

    # Merged-batch projections on the MXU; bias folded into Wh once (a [bB*P, Bo]
    # add instead of a [P, T, Bo] add per batch row inside the broadcast below).
    Wh = jnp.dot(phr.reshape(bB * P, Q), Ww,
                 preferred_element_type=jnp.float32) + bvec          # [bB*P, Bo]
    Uv = jnp.dot(vis.reshape(bB * T, F), Uw,
                 preferred_element_type=jnp.float32)                 # [bB*T, Bo]

    # Energy / softmax / aggregation, statically unrolled over the small batch block.
    for i in range(bB):
        Wh_i = Wh[i * P:(i + 1) * P, :]                              # [P, Bo]
        Uv_i = Uv[i * T:(i + 1) * T, :]                              # [T, Bo]
        vis_i = vis[i]                                               # [T, F]

        # Additive-attention bottleneck, then contract Bo with the scoring row w.
        h = jnp.tanh(Wh_i[:, None, :] + Uv_i[None, :, :])            # [P, T, Bo]
        en = jnp.sum(h * wrow[None, :, :], axis=-1)                  # [P, T]

        # Softmax over the visual axis (lane axis).  Exact divide: weights must be
        # a strict probability distribution to match the PyTorch reference.
        m = jnp.max(en, axis=-1, keepdims=True)                      # [P, 1]
        ex = jnp.exp(en - m)                                         # [P, T]
        denom = jnp.sum(ex, axis=-1, keepdims=True)                  # [P, 1]
        w = ex / denom                                               # [P, T]

        # Aligned visual features: one MXU matmul, lane-dense [P, F] tile.
        aligned = jnp.dot(w, vis_i, preferred_element_type=jnp.float32)  # [P, F]

        aligned_ref[i] = aligned.astype(aligned_ref.dtype)
        w_ref[i] = w.astype(w_ref.dtype)
        e_ref[i] = en.astype(e_ref.dtype)


def semantic_alignment(phr_feats, vis_feats, Ww, Uw, b, ww, *, block_b=1):
    """phr_feats: [B, P, Q], vis_feats: [B, T, F], Ww: [Q, Bo], Uw: [F, Bo],
    b: [1, Bo], ww: [1, Bo].
    Returns (aligned [B,P,F], weights [B,P,T], energies [B,P,T])."""
    B, P, Q = phr_feats.shape
    _, T, F = vis_feats.shape
    Bo = Ww.shape[1]
    assert B % block_b == 0, "block_b must divide the batch size"
    grid = (B // block_b,)

    out_shapes = (
        jax.ShapeDtypeStruct((B, P, F), jnp.float32),   # aligned_vis_feats
        jax.ShapeDtypeStruct((B, P, T), jnp.float32),   # weights
        jax.ShapeDtypeStruct((B, P, T), jnp.float32),   # energies
    )

    in_specs = [
        pl.BlockSpec((block_b, P, Q), lambda bi: (bi, 0, 0)),   # phr_feats
        pl.BlockSpec((block_b, T, F), lambda bi: (bi, 0, 0)),   # vis_feats
        pl.BlockSpec((Q, Bo), lambda bi: (0, 0)),               # Ww (shared)
        pl.BlockSpec((F, Bo), lambda bi: (0, 0)),               # Uw (shared)
        pl.BlockSpec((1, Bo), lambda bi: (0, 0)),               # b
        pl.BlockSpec((1, Bo), lambda bi: (0, 0)),               # w (scoring row)
    ]
    out_specs = (
        pl.BlockSpec((block_b, P, F), lambda bi: (bi, 0, 0)),
        pl.BlockSpec((block_b, P, T), lambda bi: (bi, 0, 0)),
        pl.BlockSpec((block_b, P, T), lambda bi: (bi, 0, 0)),
    )

    flops = 2 * B * (P * Q * Bo + T * F * Bo + P * T * Bo + P * T * F)
    transcendentals = B * P * T * Bo + B * P * T          # tanh + exp
    bytes_accessed = 4 * (B * P * Q + B * T * F + Q * Bo + F * Bo + 2 * Bo
                          + B * P * F + 2 * B * P * T)

    return pl.pallas_call(
        semantic_alignment_kernel,
        out_shape=out_shapes,
        grid=grid,
        in_specs=in_specs,
        out_specs=out_specs,
        compiler_params=pltpu.CompilerParams(
            dimension_semantics=("parallel",)),
        cost_estimate=pl.CostEstimate(
            flops=flops,
            transcendentals=transcendentals,
            bytes_accessed=bytes_accessed),
    )(phr_feats, vis_feats, Ww, Uw, b, ww)


def reference(phr_feats, vis_feats, Ww, Uw, b, ww):
    """Pure-JAX re-statement of the PyTorch SemanticAlignment forward."""
    hp = jax.lax.Precision.HIGHEST
    Wh = jnp.einsum("bpq,qn->bpn", phr_feats, Ww, precision=hp)        # [B, P, Bo]
    Uv = jnp.einsum("btf,fn->btn", vis_feats, Uw, precision=hp)        # [B, T, Bo]
    h = jnp.tanh(Wh[:, :, None, :] + Uv[:, None, :, :] + b.reshape(1, 1, 1, -1))
    energies = jnp.einsum("bptn,n->bpt", h, ww.reshape(-1), precision=hp)   # [B, P, T]
    weights = jax.nn.softmax(energies, axis=2)
    aligned = jnp.einsum("bpt,btf->bpf", weights, vis_feats, precision=hp)  # [B, P, F]
    return aligned, weights, energies


if __name__ == "__main__":
    B = 4          # batch
    P = 8          # number of phrase queries
    T = 16         # number of visual features (sequence)
    Q = 32         # query_size
    F = 32         # feat_size
    Bo = 32        # bottleneck_size
    block_b = 2    # batch rows per grid step -> grid=(2,), keeps both v7x TCs busy

    key = jax.random.PRNGKey(0)
    kp, kv, k1, k2, k3 = jax.random.split(key, 5)
    phr_feats = jax.random.normal(kp, (B, P, Q), jnp.float32)
    vis_feats = jax.random.normal(kv, (B, T, F), jnp.float32)

    # nn.Linear weights pre-transposed to [in, out]; b initialized to ones as in __init__.
    Ww = jax.random.normal(k1, (Q, Bo), jnp.float32) / jnp.sqrt(jnp.float32(Q))
    Uw = jax.random.normal(k2, (F, Bo), jnp.float32) / jnp.sqrt(jnp.float32(F))
    bparam = jnp.ones((1, Bo), jnp.float32)
    ww = jax.random.normal(k3, (1, Bo), jnp.float32) / jnp.sqrt(jnp.float32(Bo))

    aligned, weights, energies = jax.block_until_ready(
        semantic_alignment(phr_feats, vis_feats, Ww, Uw, bparam, ww,
                           block_b=block_b))

    ra, rw, re = reference(phr_feats, vis_feats, Ww, Uw, bparam, ww)
    assert aligned.shape == (B, P, F)
    assert weights.shape == (B, P, T)
    assert energies.shape == (B, P, T)
    # Tolerances leave margin for MXU f32 accumulation-order differences vs the
    # pure-XLA reference; the softmax itself is exact (no approx reciprocal).
    assert jnp.allclose(energies, re, atol=2e-3, rtol=2e-3)
    assert jnp.allclose(weights, rw, atol=2e-3, rtol=2e-3)
    assert jnp.allclose(aligned, ra, atol=2e-3, rtol=2e-3)

    print("KERNEL_OK")
</pallas_src>

<mosaic_0001>
module attributes {stable_mosaic.version = 11 : i64} {
  func.func @semantic_alignment_kernel(%arg0: i32, %arg1: memref<2x8x32xf32, #tpu.memory_space<vmem>>, %arg2: memref<2x16x32xf32, #tpu.memory_space<vmem>>, %arg3: memref<32x32xf32, #tpu.memory_space<vmem>>, %arg4: memref<32x32xf32, #tpu.memory_space<vmem>>, %arg5: memref<1x32xf32, #tpu.memory_space<vmem>>, %arg6: memref<1x32xf32, #tpu.memory_space<vmem>>, %arg7: memref<2x8x32xf32, #tpu.memory_space<vmem>>, %arg8: memref<2x8x16xf32, #tpu.memory_space<vmem>>, %arg9: memref<2x8x16xf32, #tpu.memory_space<vmem>>) attributes {dimension_semantics = [#tpu.dimension_semantics<parallel>], iteration_bounds = array<i64: 2>, scalar_prefetch = 0 : i64, scratch_operands = 0 : i64, tpu.core_type = #tpu.core_type<tc>, window_params = [{transform_indices = @transform_0, window_bounds = array<i64: 2, 8, 32>}, {transform_indices = @transform_1, window_bounds = array<i64: 2, 16, 32>}, {pipeline_mode = #tpu.pipeline_mode<synchronous>, transform_indices = @transform_2, window_bounds = array<i64: 32, 32>}, {pipeline_mode = #tpu.pipeline_mode<synchronous>, transform_indices = @transform_3, window_bounds = array<i64: 32, 32>}, {pipeline_mode = #tpu.pipeline_mode<synchronous>, transform_indices = @transform_4, window_bounds = array<i64: 1, 32>}, {pipeline_mode = #tpu.pipeline_mode<synchronous>, transform_indices = @transform_5, window_bounds = array<i64: 1, 32>}, {transform_indices = @transform_6, window_bounds = array<i64: 2, 8, 32>}, {transform_indices = @transform_7, window_bounds = array<i64: 2, 8, 16>}, {transform_indices = @transform_8, window_bounds = array<i64: 2, 8, 16>}]} {
    %c0 = arith.constant 0 : index
    %c0_0 = arith.constant 0 : index
    %c0_1 = arith.constant 0 : index
    %0 = vector.load %arg1[%c0, %c0_0, %c0_1] : memref<2x8x32xf32, #tpu.memory_space<vmem>>, vector<2x8x32xf32>
    %c0_2 = arith.constant 0 : index
    %c0_3 = arith.constant 0 : index
    %c0_4 = arith.constant 0 : index
    %1 = vector.load %arg2[%c0_2, %c0_3, %c0_4] : memref<2x16x32xf32, #tpu.memory_space<vmem>>, vector<2x16x32xf32>
    %c0_5 = arith.constant 0 : index
    %c0_6 = arith.constant 0 : index
    %2 = vector.load %arg3[%c0_5, %c0_6] : memref<32x32xf32, #tpu.memory_space<vmem>>, vector<32x32xf32>
    %c0_7 = arith.constant 0 : index
    %c0_8 = arith.constant 0 : index
    %3 = vector.load %arg4[%c0_7, %c0_8] : memref<32x32xf32, #tpu.memory_space<vmem>>, vector<32x32xf32>
    %c0_9 = arith.constant 0 : index
    %c0_10 = arith.constant 0 : index
    %4 = vector.load %arg5[%c0_9, %c0_10] : memref<1x32xf32, #tpu.memory_space<vmem>>, vector<1x32xf32>
    %c0_11 = arith.constant 0 : index
    %c0_12 = arith.constant 0 : index
    %5 = vector.load %arg6[%c0_11, %c0_12] : memref<1x32xf32, #tpu.memory_space<vmem>>, vector<1x32xf32>
    %6 = vector.shape_cast %0 : vector<2x8x32xf32> to vector<16x32xf32>
    %cst = arith.constant dense<0.000000e+00> : vector<16x32xf32>
    %7 = tpu.matmul %6, %2, %cst {dimension_numbers = #tpu.dot_dimension_numbers<[1], [0], [0], [1], [0, 0, 1, 1], [], []>} : vector<16x32xf32>, vector<32x32xf32>, vector<16x32xf32> -> vector<16x32xf32>
    %8 = vector.broadcast %4 : vector<1x32xf32> to vector<16x32xf32>
    %9 = arith.addf %7, %8 : vector<16x32xf32>
    %10 = vector.shape_cast %1 : vector<2x16x32xf32> to vector<32x32xf32>
    %cst_13 = arith.constant dense<0.000000e+00> : vector<32x32xf32>
    %11 = tpu.matmul %10, %3, %cst_13 {dimension_numbers = #tpu.dot_dimension_numbers<[1], [0], [0], [1], [0, 0, 1, 1], [], []>} : vector<32x32xf32>, vector<32x32xf32>, vector<32x32xf32> -> vector<32x32xf32>
    %12 = vector.extract_strided_slice %9 {offsets = [0, 0], sizes = [8, 32], strides = [1, 1]} : vector<16x32xf32> to vector<8x32xf32>
    %13 = vector.extract_strided_slice %11 {offsets = [0, 0], sizes = [16, 32], strides = [1, 1]} : vector<32x32xf32> to vector<16x32xf32>
    %14 = vector.extract_strided_slice %1 {offsets = [0, 0, 0], sizes = [1, 16, 32], strides = [1, 1, 1]} : vector<2x16x32xf32> to vector<1x16x32xf32>
    %15 = vector.shape_cast %14 : vector<1x16x32xf32> to vector<16x32xf32>
    %16 = vector.shape_cast %12 : vector<8x32xf32> to vector<8x1x32xf32>
    %17 = vector.shape_cast %13 : vector<16x32xf32> to vector<1x16x32xf32>
    %18 = vector.broadcast %16 : vector<8x1x32xf32> to vector<8x16x32xf32>
    %19 = vector.broadcast %17 : vector<1x16x32xf32> to vector<8x16x32xf32>
    %20 = arith.addf %18, %19 : vector<8x16x32xf32>
    %21 = math.tanh %20 : vector<8x16x32xf32>
    %22 = vector.shape_cast %5 : vector<1x32xf32> to vector<1x1x32xf32>
    %23 = vector.broadcast %22 : vector<1x1x32xf32> to vector<8x16x32xf32>
    %24 = arith.mulf %21, %23 : vector<8x16x32xf32>
    %cst_14 = arith.constant dense<0.000000e+00> : vector<8x16xf32>
    %25 = vector.multi_reduction <add>, %24, %cst_14 [2] : vector<8x16x32xf32> to vector<8x16xf32>
    %cst_15 = arith.constant dense<0xFF800000> : vector<8xf32>
    %26 = vector.multi_reduction <maximumf>, %25, %cst_15 [1] : vector<8x16xf32> to vector<8xf32>
    %27 = vector.shape_cast %26 : vector<8xf32> to vector<8x1xf32>
    %28 = vector.broadcast %27 : vector<8x1xf32> to vector<8x16xf32>
    %29 = arith.subf %25, %28 : vector<8x16xf32>
    %30 = math.exp %29 : vector<8x16xf32>
    %cst_16 = arith.constant dense<0.000000e+00> : vector<8xf32>
    %31 = vector.multi_reduction <add>, %30, %cst_16 [1] : vector<8x16xf32> to vector<8xf32>
    %32 = vector.shape_cast %31 : vector<8xf32> to vector<8x1xf32>
    %33 = vector.broadcast %32 : vector<8x1xf32> to vector<8x16xf32>
    %34 = arith.divf %30, %33 : vector<8x16xf32>
    %cst_17 = arith.constant dense<0.000000e+00> : vector<8x32xf32>
    %35 = tpu.matmul %34, %15, %cst_17 {dimension_numbers = #tpu.dot_dimension_numbers<[1], [0], [0], [1], [0, 0, 1, 1], [], []>} : vector<8x16xf32>, vector<16x32xf32>, vector<8x32xf32> -> vector<8x32xf32>
    %c0_18 = arith.constant 0 : index
    %c0_19 = arith.constant 0 : index
    %c0_20 = arith.constant 0 : index
    %36 = vector.load %arg7[%c0_18, %c0_19, %c0_20] : memref<2x8x32xf32, #tpu.memory_space<vmem>>, vector<1x8x32xf32>
    %37 = vector.shape_cast %36 : vector<1x8x32xf32> to vector<8x32xf32>
    %38 = vector.shape_cast %35 : vector<8x32xf32> to vector<1x8x32xf32>
    tpu.vector_store %arg7[%c0_18, %c0_19, %c0_20], %38 {strides = array<i32>} : memref<2x8x32xf32, #tpu.memory_space<vmem>>, vector<1x8x32xf32>,
    %c0_21 = arith.constant 0 : index
    %c0_22 = arith.constant 0 : index
    %c0_23 = arith.constant 0 : index
    %39 = vector.load %arg8[%c0_21, %c0_22, %c0_23] : memref<2x8x16xf32, #tpu.memory_space<vmem>>, vector<1x8x16xf32>
    %40 = vector.shape_cast %39 : vector<1x8x16xf32> to vector<8x16xf32>
    %41 = vector.shape_cast %34 : vector<8x16xf32> to vector<1x8x16xf32>
    tpu.vector_store %arg8[%c0_21, %c0_22, %c0_23], %41 {strides = array<i32>} : memref<2x8x16xf32, #tpu.memory_space<vmem>>, vector<1x8x16xf32>,
    %c0_24 = arith.constant 0 : index
    %c0_25 = arith.constant 0 : index
    %c0_26 = arith.constant 0 : index
    %42 = vector.load %arg9[%c0_24, %c0_25, %c0_26] : memref<2x8x16xf32, #tpu.memory_space<vmem>>, vector<1x8x16xf32>
    %43 = vector.shape_cast %42 : vector<1x8x16xf32> to vector<8x16xf32>
    %44 = vector.shape_cast %25 : vector<8x16xf32> to vector<1x8x16xf32>
    tpu.vector_store %arg9[%c0_24, %c0_25, %c0_26], %44 {strides = array<i32>} : memref<2x8x16xf32, #tpu.memory_space<vmem>>, vector<1x8x16xf32>,
    %45 = vector.extract_strided_slice %9 {offsets = [8, 0], sizes = [8, 32], strides = [1, 1]} : vector<16x32xf32> to vector<8x32xf32>
    %46 = vector.extract_strided_slice %11 {offsets = [16, 0], sizes = [16, 32], strides = [1, 1]} : vector<32x32xf32> to vector<16x32xf32>
    %47 = vector.extract_strided_slice %1 {offsets = [1, 0, 0], sizes = [1, 16, 32], strides = [1, 1, 1]} : vector<2x16x32xf32> to vector<1x16x32xf32>
    %48 = vector.shape_cast %47 : vector<1x16x32xf32> to vector<16x32xf32>
    %49 = vector.shape_cast %45 : vector<8x32xf32> to vector<8x1x32xf32>
    %50 = vector.shape_cast %46 : vector<16x32xf32> to vector<1x16x32xf32>
    %51 = vector.broadcast %49 : vector<8x1x32xf32> to vector<8x16x32xf32>
    %52 = vector.broadcast %50 : vector<1x16x32xf32> to vector<8x16x32xf32>
    %53 = arith.addf %51, %52 : vector<8x16x32xf32>
    %54 = math.tanh %53 : vector<8x16x32xf32>
    %55 = vector.shape_cast %5 : vector<1x32xf32> to vector<1x1x32xf32>
    %56 = vector.broadcast %55 : vector<1x1x32xf32> to vector<8x16x32xf32>
    %57 = arith.mulf %54, %56 : vector<8x16x32xf32>
    %cst_27 = arith.constant dense<0.000000e+00> : vector<8x16xf32>
    %58 = vector.multi_reduction <add>, %57, %cst_27 [2] : vector<8x16x32xf32> to vector<8x16xf32>
    %cst_28 = arith.constant dense<0xFF800000> : vector<8xf32>
    %59 = vector.multi_reduction <maximumf>, %58, %cst_28 [1] : vector<8x16xf32> to vector<8xf32>
    %60 = vector.shape_cast %59 : vector<8xf32> to vector<8x1xf32>
    %61 = vector.broadcast %60 : vector<8x1xf32> to vector<8x16xf32>
    %62 = arith.subf %58, %61 : vector<8x16xf32>
    %63 = math.exp %62 : vector<8x16xf32>
    %cst_29 = arith.constant dense<0.000000e+00> : vector<8xf32>
    %64 = vector.multi_reduction <add>, %63, %cst_29 [1] : vector<8x16xf32> to vector<8xf32>
    %65 = vector.shape_cast %64 : vector<8xf32> to vector<8x1xf32>
    %66 = vector.broadcast %65 : vector<8x1xf32> to vector<8x16xf32>
    %67 = arith.divf %63, %66 : vector<8x16xf32>
    %cst_30 = arith.constant dense<0.000000e+00> : vector<8x32xf32>
    %68 = tpu.matmul %67, %48, %cst_30 {dimension_numbers = #tpu.dot_dimension_numbers<[1], [0], [0], [1], [0, 0, 1, 1], [], []>} : vector<8x16xf32>, vector<16x32xf32>, vector<8x32xf32> -> vector<8x32xf32>
    %c1 = arith.constant 1 : index
    %c0_31 = arith.constant 0 : index
    %c0_32 = arith.constant 0 : index
    %69 = vector.load %arg7[%c1, %c0_31, %c0_32] : memref<2x8x32xf32, #tpu.memory_space<vmem>>, vector<1x8x32xf32>
    %70 = vector.shape_cast %69 : vector<1x8x32xf32> to vector<8x32xf32>
    %71 = vector.shape_cast %68 : vector<8x32xf32> to vector<1x8x32xf32>
    tpu.vector_store %arg7[%c1, %c0_31, %c0_32], %71 {strides = array<i32>} : memref<2x8x32xf32, #tpu.memory_space<vmem>>, vector<1x8x32xf32>,
    %c1_33 = arith.constant 1 : index
    %c0_34 = arith.constant 0 : index
    %c0_35 = arith.constant 0 : index
    %72 = vector.load %arg8[%c1_33, %c0_34, %c0_35] : memref<2x8x16xf32, #tpu.memory_space<vmem>>, vector<1x8x16xf32>
    %73 = vector.shape_cast %72 : vector<1x8x16xf32> to vector<8x16xf32>
    %74 = vector.shape_cast %67 : vector<8x16xf32> to vector<1x8x16xf32>
    tpu.vector_store %arg8[%c1_33, %c0_34, %c0_35], %74 {strides = array<i32>} : memref<2x8x16xf32, #tpu.memory_space<vmem>>, vector<1x8x16xf32>,
    %c1_36 = arith.constant 1 : index
    %c0_37 = arith.constant 0 : index
    %c0_38 = arith.constant 0 : index
    %75 = vector.load %arg9[%c1_36, %c0_37, %c0_38] : memref<2x8x16xf32, #tpu.memory_space<vmem>>, vector<1x8x16xf32>
    %76 = vector.shape_cast %75 : vector<1x8x16xf32> to vector<8x16xf32>
    %77 = vector.shape_cast %58 : vector<8x16xf32> to vector<1x8x16xf32>
    tpu.vector_store %arg9[%c1_36, %c0_37, %c0_38], %77 {strides = array<i32>} : memref<2x8x16xf32, #tpu.memory_space<vmem>>, vector<1x8x16xf32>,
    return
  }
  func.func @transform_0(%arg0: i32) -> (i32, i32, i32) {
    %c0_i32 = arith.constant 0 : i32
    %c0_i32_0 = arith.constant 0 : i32
    %c0_i32_1 = arith.constant 0 : i32
    return %arg0, %c0_i32, %c0_i32_0 : i32, i32, i32
  }
  func.func @transform_1(%arg0: i32) -> (i32, i32, i32) {
    %c0_i32 = arith.constant 0 : i32
    %c0_i32_0 = arith.constant 0 : i32
    %c0_i32_1 = arith.constant 0 : i32
    return %arg0, %c0_i32, %c0_i32_0 : i32, i32, i32
  }
  func.func @transform_2(%arg0: i32) -> (i32, i32) {
    %c0_i32 = arith.constant 0 : i32
    %c0_i32_0 = arith.constant 0 : i32
    %c0_i32_1 = arith.constant 0 : i32
    return %c0_i32, %c0_i32_0 : i32, i32
  }
  func.func @transform_3(%arg0: i32) -> (i32, i32) {
    %c0_i32 = arith.constant 0 : i32
    %c0_i32_0 = arith.constant 0 : i32
    %c0_i32_1 = arith.constant 0 : i32
    return %c0_i32, %c0_i32_0 : i32, i32
  }
  func.func @transform_4(%arg0: i32) -> (i32, i32) {
    %c0_i32 = arith.constant 0 : i32
    %c0_i32_0 = arith.constant 0 : i32
    %c0_i32_1 = arith.constant 0 : i32
    return %c0_i32, %c0_i32_0 : i32, i32
  }
  func.func @transform_5(%arg0: i32) -> (i32, i32) {
    %c0_i32 = arith.constant 0 : i32
    %c0_i32_0 = arith.constant 0 : i32
    %c0_i32_1 = arith.constant 0 : i32
    return %c0_i32, %c0_i32_0 : i32, i32
  }
  func.func @transform_6(%arg0: i32) -> (i32, i32, i32) {
    %c0_i32 = arith.constant 0 : i32
    %c0_i32_0 = arith.constant 0 : i32
    %c0_i32_1 = arith.constant 0 : i32
    return %arg0, %c0_i32, %c0_i32_0 : i32, i32, i32
  }
  func.func @transform_7(%arg0: i32) -> (i32, i32, i32) {
    %c0_i32 = arith.constant 0 : i32
    %c0_i32_0 = arith.constant 0 : i32
    %c0_i32_1 = arith.constant 0 : i32
    return %arg0, %c0_i32, %c0_i32_0 : i32, i32, i32
  }
  func.func @transform_8(%arg0: i32) -> (i32, i32, i32) {
    %c0_i32 = arith.constant 0 : i32
    %c0_i32_0 = arith.constant 0 : i32
    %c0_i32_1 = arith.constant 0 : i32
    return %arg0, %c0_i32, %c0_i32_0 : i32, i32, i32
  }
}

</mosaic_0001>

<llo_original>
// kernel: tpu_custom_call.1
$region0: #{tpu_custom_call.1}
  #allocation0 [shape = 'u32[]', space=smem, size = 0x4, offset = 0x4, fixed_abs, tag = 'smem constant byte address 0x4 - core index']
  #allocation1 [shape = 'u32[144,128]{1,0:T(1,128)}', space=vmem, size = 0x12000, scoped, tag = 'internal scratch']
  %s0 = inlined_call_operand.hbm [shape: f32[4,8,32], index: 0, kind: input, shape index: {}]
  %s1 = inlined_call_operand.hbm [shape: f32[4,16,32], index: 1, kind: input, shape index: {}]
  %s2 = inlined_call_operand.hbm [shape: f32[32,32], index: 2, kind: input, shape index: {}]
  %s3 = inlined_call_operand.hbm [shape: f32[32,32], index: 3, kind: input, shape index: {}]
  %s4 = inlined_call_operand.vmem [shape: f32[1,32], index: 4, kind: input, shape index: {}]
  %s5 = inlined_call_operand.vmem [shape: f32[1,32], index: 5, kind: input, shape index: {}]
  %s6 = inlined_call_operand.hbm [shape: f32[4,8,32], index: 6, kind: output, shape index: {0}]
  %s7 = inlined_call_operand.hbm [shape: f32[4,8,16], index: 7, kind: output, shape index: {1}]
  %s8 = inlined_call_operand.hbm [shape: f32[4,8,16], index: 8, kind: output, shape index: {2}]
  %9 = xla_tuple %s6, %s7, %s8
  %s10 = sld [smem:[#allocation0]]
  $region89: #{tpu_custom_call.1} parent=0
    _
  %s12 = ssub.s32 1, %s10
  %s13 = scalar_select 0, %s12, %s10
  $region1: #{tpu_custom_call.1} parent=0
    #allocation2 [shape = 'u8[16384]{0}', space=vmem, size = 0x4000, scoped, tag = 'input window, operand 0']
    #allocation3 [shape = 's32[2]{0}', space=sflag, size = 0x8, scoped, tag = 'scoped memory for tpu_custom_call.1']
    #allocation4 [shape = 's32[2]{0}', space=sflag, size = 0x8, scoped, tag = 'scoped memory for tpu_custom_call.1']
    #allocation5 [shape = 'u8[32768]{0}', space=vmem, size = 0x8000, scoped, tag = 'input window, operand 1']
    #allocation6 [shape = 's32[2]{0}', space=sflag, size = 0x8, scoped, tag = 'scoped memory for tpu_custom_call.1']
    #allocation7 [shape = 'u8[16384]{0}', space=vmem, size = 0x4000, scoped, tag = 'input window, operand 2, single buffered']
    #allocation8 [shape = 'u8[16384]{0}', space=vmem, size = 0x4000, scoped, tag = 'input window, operand 3, single buffered']
    #allocation9 [shape = 's32[1]{0}', space=sflag, size = 0x4, scoped, tag = 'scoped memory for tpu_custom_call.1']
    #allocation10 [shape = 'u8[16384]{0}', space=vmem, size = 0x4000, scoped, tag = 'output window, operand 0']
    #allocation11 [shape = 'u8[16384]{0}', space=vmem, size = 0x4000, scoped, tag = 'output window, operand 1']
    #allocation12 [shape = 's32[2]{0}', space=sflag, size = 0x8, scoped, tag = 'scoped memory for tpu_custom_call.1']
    #allocation13 [shape = 'u8[16384]{0}', space=vmem, size = 0x4000, scoped, tag = 'output window, operand 2']
    %14 = vsyncpa [#allocation3], 0
    %s15 = scalar_lea.sflag [#allocation3], 1
    %16 = vsyncpa %s15, 0
    %17 = vsyncpa [#allocation6], 0
    %s18 = scalar_lea.sflag [#allocation6], 1
    %19 = vsyncpa %s18, 0
    %20 = vsyncpa [#allocation9], 0
    %21 = vsyncpa [#allocation4], 0
    %s22 = scalar_lea.sflag [#allocation4], 1
    %23 = vsyncpa %s22, 0
    %24 = vsyncpa [#allocation12], 0
    %s25 = scalar_lea.sflag [#allocation12], 1
    %26 = vsyncpa %s25, 0
    loop: start=0, step=1, limit=4
    $region2: #{tpu_custom_call.1} parent=1 // loop_pre_header
      _
    $region3: #{tpu_custom_call.1} parent=1 // loop_header
      %s28 = sphi 0, %s32
      %p29 = scmp.ge.s32.totalorder %s28, 4
      %s38 = sphi 0, %s40
      %s41 = sphi 0, %s38
      %s42 = sphi 0, %s41
      %s58 = sphi 0, %s42
      %s64 = sphi 0, %s66
      %s67 = sphi 0, %s64
      %s68 = sphi 0, %s67
      %s84 = sphi 0, %s68
      %s88 = sphi 0, %s88
      %s90 = sphi 0, %s88
      %s91 = sphi 0, %s90
      %s105 = sphi 0, %s91
      %s109 = sphi 0, %s109
      %s111 = sphi 0, %s109
      %s112 = sphi 0, %s111
      %s126 = sphi 0, %s112
      %s130 = sphi 0, %s130
      %s132 = sphi 0, %s130
      %s133 = sphi 0, %s132
      %s147 = sphi 0, %s133
      %s151 = sphi 0, %s151
      %s153 = sphi 0, %s151
      %s154 = sphi 0, %s153
      %s168 = sphi 0, %s154
      %s174 = sphi 0, %s176
      %s177 = sphi 0, %s174
      %s178 = sphi 0, %s177
      %s194 = sphi 0, %s178
      %s200 = sphi 0, %s202
      %s203 = sphi 0, %s200
      %s204 = sphi 0, %s203
      %s220 = sphi 0, %s204
      %s226 = sphi 0, %s228
      %s229 = sphi 0, %s226
      %s230 = sphi 0, %s229
      %s246 = sphi 0, %s230
    $region4: #{tpu_custom_call.1} parent=1 // loop_header_branch
      %31 = sbr.rel (%p29) target = $region8
    $region5: #{tpu_custom_call.1} parent=1 // loop_body
      %s33 = ssub.s32 %s28, 1
      %s34 = ssub.s32 %s28, 2
      %s35 = sadd.s32 %s28, 1
      %s36 = ssub.s32 %s28, %s35
      %p37 = scmp.eq.s32.totalorder %s36, 0
      %s39 = sadd.s32 %s38, 1
      %s40 = scalar_select %p37, %s38, %s39
      %p43 = pneg %p37
      %p44 = scmp.eq.s32.totalorder %s28, 1
      %p45 = por %p43, %p44
      %p46 = scmp.ne.s32.totalorder %s38, %s41
      %p47 = scmp.eq.s32.totalorder %s28, 0
      %p48 = por %p46, %p47
      %p49 = scmp.ne.s32.totalorder %s38, %s41
      %p50 = scmp.eq.s32.totalorder %s33, 1
      %p51 = por %p49, %p50
      %p52 = scmp.ne.s32.totalorder %s41, %s42
      %p53 = scmp.eq.s32.totalorder %s33, 0
      %p54 = por %p52, %p53
      %p55 = scmp.ne.s32.totalorder %s41, %s42
      %p56 = scmp.eq.s32.totalorder %s34, 1
      %p57 = por %p55, %p56
      %p59 = scmp.ne.s32.totalorder %s42, %s58
      %p60 = scmp.eq.s32.totalorder %s34, 0
      %p61 = por %p59, %p60
      %s62 = ssub.s32 %s28, %s35
      %p63 = scmp.eq.s32.totalorder %s62, 0
      %s65 = sadd.s32 %s64, 1
      %s66 = scalar_select %p63, %s64, %s65
      %p69 = pneg %p63
      %p70 = scmp.eq.s32.totalorder %s28, 1
      %p71 = por %p69, %p70
      %p72 = scmp.ne.s32.totalorder %s64, %s67
      %p73 = scmp.eq.s32.totalorder %s28, 0
      %p74 = por %p72, %p73
      %p75 = scmp.ne.s32.totalorder %s64, %s67
      %p76 = scmp.eq.s32.totalorder %s33, 1
      %p77 = por %p75, %p76
      %p78 = scmp.ne.s32.totalorder %s67, %s68
      %p79 = scmp.eq.s32.totalorder %s33, 0
      %p80 = por %p78, %p79
      %p81 = scmp.ne.s32.totalorder %s67, %s68
      %p82 = scmp.eq.s32.totalorder %s34, 1
      %p83 = por %p81, %p82
      %p85 = scmp.ne.s32.totalorder %s68, %s84
      %p86 = scmp.eq.s32.totalorder %s34, 0
      %p87 = por %p85, %p86
      %s89 = sadd.s32 %s88, 1
      %p92 = scmp.eq.s32.totalorder %s28, 1
      %p93 = scmp.ne.s32.totalorder %s88, %s90
      %p94 = scmp.eq.s32.totalorder %s28, 0
      %p95 = por %p93, %p94
      %p96 = scmp.ne.s32.totalorder %s88, %s90
      %p97 = scmp.eq.s32.totalorder %s33, 1
      %p98 = por %p96, %p97
      %p99 = scmp.ne.s32.totalorder %s90, %s91
      %p100 = scmp.eq.s32.totalorder %s33, 0
      %p101 = por %p99, %p100
      %p102 = scmp.ne.s32.totalorder %s90, %s91
      %p103 = scmp.eq.s32.totalorder %s34, 1
      %p104 = por %p102, %p103
      %p106 = scmp.ne.s32.totalorder %s91, %s105
      %p107 = scmp.eq.s32.totalorder %s34, 0
      %p108 = por %p106, %p107
      %s110 = sadd.s32 %s109, 1
      %p113 = scmp.eq.s32.totalorder %s28, 1
      %p114 = scmp.ne.s32.totalorder %s109, %s111
      %p115 = scmp.eq.s32.totalorder %s28, 0
      %p116 = por %p114, %p115
      %p117 = scmp.ne.s32.totalorder %s109, %s111
      %p118 = scmp.eq.s32.totalorder %s33, 1
      %p119 = por %p117, %p118
      %p120 = scmp.ne.s32.totalorder %s111, %s112
      %p121 = scmp.eq.s32.totalorder %s33, 0
      %p122 = por %p120, %p121
      %p123 = scmp.ne.s32.totalorder %s111, %s112
      %p124 = scmp.eq.s32.totalorder %s34, 1
      %p125 = por %p123, %p124
      %p127 = scmp.ne.s32.totalorder %s112, %s126
      %p128 = scmp.eq.s32.totalorder %s34, 0
      %p129 = por %p127, %p128
      %s131 = sadd.s32 %s130, 1
      %p134 = scmp.eq.s32.totalorder %s28, 1
      %p135 = scmp.ne.s32.totalorder %s130, %s132
      %p136 = scmp.eq.s32.totalorder %s28, 0
      %p137 = por %p135, %p136
      %p138 = scmp.ne.s32.totalorder %s130, %s132
      %p139 = scmp.eq.s32.totalorder %s33, 1
      %p140 = por %p138, %p139
      %p141 = scmp.ne.s32.totalorder %s132, %s133
      %p142 = scmp.eq.s32.totalorder %s33, 0
      %p143 = por %p141, %p142
      %p144 = scmp.ne.s32.totalorder %s132, %s133
      %p145 = scmp.eq.s32.totalorder %s34, 1
      %p146 = por %p144, %p145
      %p148 = scmp.ne.s32.totalorder %s133, %s147
      %p149 = scmp.eq.s32.totalorder %s34, 0
      %p150 = por %p148, %p149
      %s152 = sadd.s32 %s151, 1
      %p155 = scmp.eq.s32.totalorder %s28, 1
      %p156 = scmp.ne.s32.totalorder %s151, %s153
      %p157 = scmp.eq.s32.totalorder %s28, 0
      %p158 = por %p156, %p157
      %p159 = scmp.ne.s32.totalorder %s151, %s153
      %p160 = scmp.eq.s32.totalorder %s33, 1
      %p161 = por %p159, %p160
      %p162 = scmp.ne.s32.totalorder %s153, %s154
      %p163 = scmp.eq.s32.totalorder %s33, 0
      %p164 = por %p162, %p163
      %p165 = scmp.ne.s32.totalorder %s153, %s154
      %p166 = scmp.eq.s32.totalorder %s34, 1
      %p167 = por %p165, %p166
      %p169 = scmp.ne.s32.totalorder %s154, %s168
      %p170 = scmp.eq.s32.totalorder %s34, 0
      %p171 = por %p169, %p170
      %s172 = ssub.s32 %s28, %s35
      %p173 = scmp.eq.s32.totalorder %s172, 0
      %s175 = sadd.s32 %s174, 1
      %s176 = scalar_select %p173, %s174, %s175
      %p179 = pneg %p173
      %p180 = scmp.eq.s32.totalorder %s28, 1
      %p181 = por %p179, %p180
      %p182 = scmp.ne.s32.totalorder %s174, %s177
      %p183 = scmp.eq.s32.totalorder %s28, 0
      %p184 = por %p182, %p183
      %p185 = scmp.ne.s32.totalorder %s174, %s177
      %p186 = scmp.eq.s32.totalorder %s33, 1
      %p187 = por %p185, %p186
      %p188 = scmp.ne.s32.totalorder %s177, %s178
      %p189 = scmp.eq.s32.totalorder %s33, 0
      %p190 = por %p188, %p189
      %p191 = scmp.ne.s32.totalorder %s177, %s178
      %p192 = scmp.eq.s32.totalorder %s34, 1
      %p193 = por %p191, %p192
      %p195 = scmp.ne.s32.totalorder %s178, %s194
      %p196 = scmp.eq.s32.totalorder %s34, 0
      %p197 = por %p195, %p196
      %s198 = ssub.s32 %s28, %s35
      %p199 = scmp.eq.s32.totalorder %s198, 0
      %s201 = sadd.s32 %s200, 1
      %s202 = scalar_select %p199, %s200, %s201
      %p205 = pneg %p199
      %p206 = scmp.eq.s32.totalorder %s28, 1
      %p207 = por %p205, %p206
      %p208 = scmp.ne.s32.totalorder %s200, %s203
      %p209 = scmp.eq.s32.totalorder %s28, 0
      %p210 = por %p208, %p209
      %p211 = scmp.ne.s32.totalorder %s200, %s203
      %p212 = scmp.eq.s32.totalorder %s33, 1
      %p213 = por %p211, %p212
      %p214 = scmp.ne.s32.totalorder %s203, %s204
      %p215 = scmp.eq.s32.totalorder %s33, 0
      %p216 = por %p214, %p215
      %p217 = scmp.ne.s32.totalorder %s203, %s204
      %p218 = scmp.eq.s32.totalorder %s34, 1
      %p219 = por %p217, %p218
      %p221 = scmp.ne.s32.totalorder %s204, %s220
      %p222 = scmp.eq.s32.totalorder %s34, 0
      %p223 = por %p221, %p222
      %s224 = ssub.s32 %s28, %s35
      %p225 = scmp.eq.s32.totalorder %s224, 0
      %s227 = sadd.s32 %s226, 1
      %s228 = scalar_select %p225, %s226, %s227
      %p231 = pneg %p225
      %p232 = scmp.eq.s32.totalorder %s28, 1
      %p233 = por %p231, %p232
      %p234 = scmp.ne.s32.totalorder %s226, %s229
      %p235 = scmp.eq.s32.totalorder %s28, 0
      %p236 = por %p234, %p235
      %p237 = scmp.ne.s32.totalorder %s226, %s229
      %p238 = scmp.eq.s32.totalorder %s33, 1
      %p239 = por %p237, %p238
      %p240 = scmp.ne.s32.totalorder %s229, %s230
      %p241 = scmp.eq.s32.totalorder %s33, 0
      %p242 = por %p240, %p241
      %p243 = scmp.ne.s32.totalorder %s229, %s230
      %p244 = scmp.eq.s32.totalorder %s34, 1
      %p245 = por %p243, %p244
      %p247 = scmp.ne.s32.totalorder %s230, %s246
      %p248 = scmp.eq.s32.totalorder %s34, 0
      %p249 = por %p247, %p248
      %p250 = scmp.le.s32.totalorder 1, %s28
      %p251 = scmp.lt.s32.totalorder %s28, 3
      %p252 = pnand %p250, %p251
      %p253 = pneg %p252
      // Predicated region
      $region9: #{tpu_custom_call.1} parent=5 // pred_check
        _
      $region10: #{tpu_custom_call.1} parent=5 // pred_check_branch
        %255 = sbr.rel (%p252) target = $region12
      $region11: #{tpu_custom_call.1} parent=5 // pred_region
        %s256 = ssub.s32 %s28, 1
        // Predicated region
        $region13: #{tpu_custom_call.1} parent=11 // pred_check
          %p257 = pneg %p101
        $region14: #{tpu_custom_call.1} parent=11 // pred_check_branch
          %259 = sbr.rel (%p257) target = $region16
        $region15: #{tpu_custom_call.1} parent=11 // pred_region
          %s261 = ssub.s32 512, 512
          %262 = vsyncadd [#allocation6], %s261
          %s263 = sshll.u32 [#allocation7], 4
          %s264 = int_to_ptr.vmem [resolvable:$true] %s263
          %269 = dma.hbm_to_vmem [thread:$0]  %s2, 512, %s264, [#allocation6], 128, 128, 8
        $region16: #{tpu_custom_call.1} parent=11 // pred_fallthru
          _
        // Predicated region
        $region17: #{tpu_custom_call.1} parent=11 // pred_check
          %p270 = pneg %p122
        $region18: #{tpu_custom_call.1} parent=11 // pred_check_branch
          %272 = sbr.rel (%p270) target = $region20
        $region19: #{tpu_custom_call.1} parent=11 // pred_region
          %s274 = ssub.s32 512, 512
          %275 = vsyncadd [#allocation9], %s274
          %s276 = sshll.u32 [#allocation8], 4
          %s277 = int_to_ptr.vmem [resolvable:$true] %s276
          %282 = dma.hbm_to_vmem [thread:$0]  %s3, 512, %s277, [#allocation9], 128, 128, 8
        $region20: #{tpu_custom_call.1} parent=11 // pred_fallthru
          _
        // Predicated region
        $region21: #{tpu_custom_call.1} parent=11 // pred_check
          %p283 = pneg %p143
        $region22: #{tpu_custom_call.1} parent=11 // pred_check_branch
          %285 = sbr.rel (%p283) target = $region24
        $region23: #{tpu_custom_call.1} parent=11 // pred_region
          _
        $region24: #{tpu_custom_call.1} parent=11 // pred_fallthru
          _
        // Predicated region
        $region25: #{tpu_custom_call.1} parent=11 // pred_check
          %p286 = pneg %p164
        $region26: #{tpu_custom_call.1} parent=11 // pred_check_branch
          %288 = sbr.rel (%p286) target = $region28
        $region27: #{tpu_custom_call.1} parent=11 // pred_region
          _
        $region28: #{tpu_custom_call.1} parent=11 // pred_fallthru
          _
      $region12: #{tpu_custom_call.1} parent=5 // pred_fallthru
        _
      %p289 = scmp.lt.s32.totalorder %s28, 2
      // Predicated region
      $region29: #{tpu_custom_call.1} parent=5 // pred_check
        %p290 = pneg %p289
      $region30: #{tpu_custom_call.1} parent=5 // pred_check_branch
        %292 = sbr.rel (%p290) target = $region32
      $region31: #{tpu_custom_call.1} parent=5 // pred_region
        // Predicated region
        $region33: #{tpu_custom_call.1} parent=31 // pred_check
          %p293 = pneg %p48
        $region34: #{tpu_custom_call.1} parent=31 // pred_check_branch
          %295 = sbr.rel (%p293) target = $region36
        $region35: #{tpu_custom_call.1} parent=31 // pred_region
          %s296 = sand.u32 %s38, 1
          %s297 = scalar_lea.sflag [#allocation3], %s296
          %s298 = sand.u32 %s38, 1
          %s299 = smul.addr %s298, 16
          %s300 = scalar_lea.vmem [#allocation2], %s299
          %s301 = smul.u32 2, %s28
          %s303 = ssub.s32 256, 256
          %304 = vsyncadd %s297, %s303
          %s305 = smul.addr %s301, 128
          %s306 = scalar_lea.hbm %s0, %s305
          %s307 = sshll.u32 %s300, 4
          %s308 = int_to_ptr.vmem [resolvable:$true] %s307
          %313 = dma.hbm_to_vmem [thread:$0]  %s306, 256, %s308, %s297, 128, 128, 8
        $region36: #{tpu_custom_call.1} parent=31 // pred_fallthru
          _
        // Predicated region
        $region37: #{tpu_custom_call.1} parent=31 // pred_check
          %p314 = pneg %p74
        $region38: #{tpu_custom_call.1} parent=31 // pred_check_branch
          %316 = sbr.rel (%p314) target = $region40
        $region39: #{tpu_custom_call.1} parent=31 // pred_region
          %s317 = sand.u32 %s28, 1
          %s318 = scalar_lea.sflag [#allocation6], %s317
          %s319 = sand.u32 %s64, 1
          %s320 = smul.addr %s319, 32
          %s321 = scalar_lea.vmem [#allocation5], %s320
          %s322 = smul.u32 2, %s28
          %s324 = ssub.s32 512, 512
          %325 = vsyncadd %s318, %s324
          %s326 = smul.addr %s322, 2
          %s327 = smul.addr %s326, 128
          %s328 = scalar_lea.hbm %s1, %s327
          %s329 = sshll.u32 %s321, 4
          %s330 = int_to_ptr.vmem [resolvable:$true] %s329
          %335 = dma.hbm_to_vmem [thread:$0]  %s328, 512, %s330, %s318, 128, 128, 8
        $region40: #{tpu_custom_call.1} parent=31 // pred_fallthru
          _
      $region32: #{tpu_custom_call.1} parent=5 // pred_fallthru
        _
      %p336 = scmp.le.s32.totalorder 1, %s28
      %p337 = scmp.lt.s32.totalorder %s28, 3
      %p338 = pnand %p336, %p337
      %p339 = pneg %p338
      // Predicated region
      $region41: #{tpu_custom_call.1} parent=5 // pred_check
        _
      $region42: #{tpu_custom_call.1} parent=5 // pred_check_branch
        %341 = sbr.rel (%p338) target = $region44
      $region43: #{tpu_custom_call.1} parent=5 // pred_region
        %s342 = ssub.s32 %s28, 1
        %s343 = sand.u32 %s41, 1
        %s344 = scalar_lea.sflag [#allocation3], %s343
        %s345 = sand.u32 %s41, 1
        %s346 = smul.addr %s345, 16
        %s347 = scalar_lea.vmem [#allocation2], %s346
        // Predicated region
        $region45: #{tpu_custom_call.1} parent=43 // pred_check
          %p348 = pneg %p54
        $region46: #{tpu_custom_call.1} parent=43 // pred_check_branch
          %350 = sbr.rel (%p348) target = $region48
        $region47: #{tpu_custom_call.1} parent=43 // pred_region
          %351 = dma.done %s344, 256
        $region48: #{tpu_custom_call.1} parent=43 // pred_fallthru
          _
        %s352 = sand.u32 %s33, 1
        %s353 = scalar_lea.sflag [#allocation6], %s352
        %s354 = sand.u32 %s67, 1
        %s355 = smul.addr %s354, 32
        %s356 = scalar_lea.vmem [#allocation5], %s355
        // Predicated region
        $region49: #{tpu_custom_call.1} parent=43 // pred_check
          %p357 = pneg %p80
        $region50: #{tpu_custom_call.1} parent=43 // pred_check_branch
          %359 = sbr.rel (%p357) target = $region52
        $region51: #{tpu_custom_call.1} parent=43 // pred_region
          %360 = dma.done %s353, 512
        $region52: #{tpu_custom_call.1} parent=43 // pred_fallthru
          _
        // Predicated region
        $region53: #{tpu_custom_call.1} parent=43 // pred_check
          %p361 = pneg %p101
        $region54: #{tpu_custom_call.1} parent=43 // pred_check_branch
          %363 = sbr.rel (%p361) target = $region56
        $region55: #{tpu_custom_call.1} parent=43 // pred_region
          %364 = dma.done [#allocation6], 512
        $region56: #{tpu_custom_call.1} parent=43 // pred_fallthru
          _
        // Predicated region
        $region57: #{tpu_custom_call.1} parent=43 // pred_check
          %p365 = pneg %p122
        $region58: #{tpu_custom_call.1} parent=43 // pred_check_branch
          %367 = sbr.rel (%p365) target = $region60
        $region59: #{tpu_custom_call.1} parent=43 // pred_region
          %368 = dma.done [#allocation9], 512
        $region60: #{tpu_custom_call.1} parent=43 // pred_fallthru
          _
        %s369 = sand.u32 %s41, 1
        %s370 = scalar_lea.sflag [#allocation3], %s369
        %s371 = sand.u32 %s41, 1
        %s372 = smul.addr %s371, 16
        %s373 = scalar_lea.vmem [#allocation2], %s372
        %p374 = pneg %p54
        %p375 = pneg %p51
        %s376 = sand.u32 %s33, 1
        %s377 = scalar_lea.sflag [#allocation6], %s376
        %s378 = sand.u32 %s67, 1
        %s379 = smul.addr %s378, 32
        %s380 = scalar_lea.vmem [#allocation5], %s379
        %p381 = pneg %p80
        %p382 = pneg %p77
        %p383 = pneg %p101
        %p384 = pneg %p98
        %p385 = pneg %p122
        %p386 = pneg %p119
        %p387 = pneg %p143
        %p388 = pneg %p140
        %p389 = pneg %p164
        %p390 = pneg %p161
        %p391 = pneg %p190
        %p392 = pneg %p187
        %s393 = sand.u32 %s177, 1
        %s394 = scalar_lea.sflag [#allocation4], %s393
        %s395 = sand.u32 %s177, 1
        %s396 = smul.addr %s395, 16
        %s397 = scalar_lea.vmem [#allocation10], %s396
        %p398 = pneg %p216
        %p399 = pneg %p213
        %s400 = sand.u32 %s33, 1
        %s401 = scalar_lea.sflag [#allocation12], %s400
        %s402 = sand.u32 %s203, 1
        %s403 = smul.addr %s402, 16
        %s404 = scalar_lea.vmem [#allocation11], %s403
        %p405 = pneg %p242
        %p406 = pneg %p239
        %s407 = sand.u32 %s33, 1
        %s408 = scalar_lea.sflag [#allocation12], %s407
        %s409 = sand.u32 %s229, 1
        %s410 = smul.addr %s409, 16
        %s411 = scalar_lea.vmem [#allocation13], %s410
        %s412 = smul.u32 2, %s33
        %s413 = smul.u32 2, %s33
        %s414 = smul.u32 2, %s33
        %s415 = smul.u32 2, %s33
        %s416 = smul.u32 2, %s33
        %v417 = vld [vmem:[%s347] sm:$0xff]
        %v418 = vld [vmem:[%s347 + $0x8] sm:$0xff]
        %v419 = vld [vmem:[%s356] sm:$0xff]
        %v420 = vld [vmem:[%s356 + $0x8] sm:$0xff]
        %v421 = vld [vmem:[%s356 + $0x10] sm:$0xff]
        %v422 = vld [vmem:[%s356 + $0x18] sm:$0xff]
        %v423 = vld [vmem:[#allocation7] sm:$0xff]
        %v424 = vld [vmem:[#allocation7 + $0x8] sm:$0xff]
        %v425 = vld [vmem:[#allocation7 + $0x10] sm:$0xff]
        %v426 = vld [vmem:[#allocation7 + $0x18] sm:$0xff]
        %v427 = vld [vmem:[#allocation8] sm:$0xff]
        %v428 = vld [vmem:[#allocation8 + $0x8] sm:$0xff]
        %v429 = vld [vmem:[#allocation8 + $0x10] sm:$0xff]
        %v430 = vld [vmem:[#allocation8 + $0x18] sm:$0xff]
        %v431 = vld [vmem:[%s4] sm:$0x1]
        %v432 = vld [vmem:[%s5] sm:$0x1]
        %v434 = vlaneseq
        %v435 = vshrl.u32 %v434, 7
        %v436 = vsub.s32 0, %v435
        %v437 = vrot.slane %v431, %v436
        %vm439 = vcmask 261120
        %v441 = vsel %vm439, %v417, 0
        %v444 = vsel %vm439, %v418, 0
        %446 = vmatprep.subr.mxu0 0.0
        %447 = vmatpush1.msra.mxu0 0.0
        %448 = vmatprep.subr.mxu0 0.0
        %449 = vmatpush1.msra.mxu0 0.0
        %450 = vmatprep.subr.mxu0 0.0
        %451 = vmatpush1.msra.mxu0 0.0
        %452 = vmatprep.subr.mxu0 0.0
        %453 = vmatpush1.msra.mxu0 0.0
        %454 = vmatprep.subr.mxu0 0.0
        %455 = vmatpush1.msra.mxu0 0.0
        %456 = vmatprep.subr.mxu0 0.0
        %457 = vmatpush1.msra.mxu0 0.0
        %458 = vmatprep.subr.mxu0 0.0
        %459 = vmatpush1.msra.mxu0 0.0
        %460 = vmatprep.subr.mxu0 0.0
        %461 = vmatpush1.msra.mxu0 0.0
        %462 = vmatprep.subr.mxu0 0.0
        %463 = vmatpush1.msra.mxu0 0.0
        %464 = vmatprep.subr.mxu0 0.0
        %465 = vmatpush1.msra.mxu0 0.0
        %466 = vmatprep.subr.mxu0 0.0
        %467 = vmatpush1.msra.mxu0 0.0
        %468 = vmatprep.subr.mxu0 0.0
        %469 = vmatpush1.msra.mxu0 0.0
        %470 = vmatprep.subr.mxu0 0.0
        %471 = vmatpush1.msra.mxu0 %v426
        %472 = vmatprep.subr.mxu0 0.0
        %473 = vmatpush1.msra.mxu0 %v425
        %474 = vmatprep.subr.mxu0 0.0
        %475 = vmatpush1.msra.mxu0 %v424
        %476 = vmatprep.subr.mxu0 0.0
        %477 = vmatpush1.msra.mxu0 %v423
        %478 = vmatprep.subr.mxu0 0.0
        %479 = vmatpush2.msra.mxu0 0.0
        %480 = vmatprep.subr.mxu0 0.0
        %481 = vmatpush2.msra.mxu0 0.0
        %482 = vmatprep.subr.mxu0 0.0
        %483 = vmatpush2.msra.mxu0 0.0
        %484 = vmatprep.subr.mxu0 0.0
        %485 = vmatpush2.msra.mxu0 0.0
        %486 = vmatprep.subr.mxu0 0.0
        %487 = vmatpush2.msra.mxu0 0.0
        %488 = vmatprep.subr.mxu0 0.0
        %489 = vmatpush2.msra.mxu0 0.0
        %490 = vmatprep.subr.mxu0 0.0
        %491 = vmatpush2.msra.mxu0 0.0
        %492 = vmatprep.subr.mxu0 0.0
        %493 = vmatpush2.msra.mxu0 0.0
        %494 = vmatprep.subr.mxu0 0.0
        %495 = vmatpush2.msra.mxu0 0.0
        %496 = vmatprep.subr.mxu0 0.0
        %497 = vmatpush2.msra.mxu0 0.0
        %498 = vmatprep.subr.mxu0 0.0
        %499 = vmatpush2.msra.mxu0 0.0
        %500 = vmatprep.subr.mxu0 0.0
        %501 = vmatpush2.msra.mxu0 0.0
        %502 = vmatprep.subr.mxu0 0.0
        %503 = vmatpush2.msra.mxu0 0.0
        %504 = vmatprep.subr.mxu0 0.0
        %505 = vmatpush2.msra.mxu0 0.0
        %506 = vmatprep.subr.mxu0 0.0
        %507 = vmatpush2.msra.mxu0 0.0
        %508 = vmatprep.subr.mxu0 0.0
        %509 = vmatpush2.msra.mxu0 0.0
        %510 = vmatprep.mubr.f32.mxu0 0.0
        %511 = vmatmul.mubr.f32.gmra.mxu0 %v441
        %v512 = vpop.f32.mrf.mxu0
        %v513 = vadd.f32 %v437, %v512
        %v514 = vpop.f32.mrf.mxu0
        %515 = vmatprep.mubr.f32.mxu0 0.0
        %516 = vmatmul.mubr.f32.gmra.mxu0 %v444
        %v517 = vpop.f32.mrf.mxu0
        %v518 = vadd.f32 %v437, %v517
        %v519 = vpop.f32.mrf.mxu0
        %520 = vdwg.mxu0
        %v522 = vsel %vm439, %v419, 0
        %v525 = vsel %vm439, %v420, 0
        %v528 = vsel %vm439, %v421, 0
        %v531 = vsel %vm439, %v422, 0
        %533 = vmatprep.subr.mxu0 0.0
        %534 = vmatpush1.msra.mxu0 0.0
        %535 = vmatprep.subr.mxu0 0.0
        %536 = vmatpush1.msra.mxu0 0.0
        %537 = vmatprep.subr.mxu0 0.0
        %538 = vmatpush1.msra.mxu0 0.0
        %539 = vmatprep.subr.mxu0 0.0
        %540 = vmatpush1.msra.mxu0 0.0
        %541 = vmatprep.subr.mxu0 0.0
        %542 = vmatpush1.msra.mxu0 0.0
        %543 = vmatprep.subr.mxu0 0.0
        %544 = vmatpush1.msra.mxu0 0.0
        %545 = vmatprep.subr.mxu0 0.0
        %546 = vmatpush1.msra.mxu0 0.0
        %547 = vmatprep.subr.mxu0 0.0
        %548 = vmatpush1.msra.mxu0 0.0
        %549 = vmatprep.subr.mxu0 0.0
        %550 = vmatpush1.msra.mxu0 0.0
        %551 = vmatprep.subr.mxu0 0.0
        %552 = vmatpush1.msra.mxu0 0.0
        %553 = vmatprep.subr.mxu0 0.0
        %554 = vmatpush1.msra.mxu0 0.0
        %555 = vmatprep.subr.mxu0 0.0
        %556 = vmatpush1.msra.mxu0 0.0
        %557 = vmatprep.subr.mxu0 0.0
        %558 = vmatpush1.msra.mxu0 %v430
        %559 = vmatprep.subr.mxu0 0.0
        %560 = vmatpush1.msra.mxu0 %v429
        %561 = vmatprep.subr.mxu0 0.0
        %562 = vmatpush1.msra.mxu0 %v428
        %563 = vmatprep.subr.mxu0 0.0
        %564 = vmatpush1.msra.mxu0 %v427
        %565 = vmatprep.subr.mxu0 0.0
        %566 = vmatpush2.msra.mxu0 0.0
        %567 = vmatprep.subr.mxu0 0.0
        %568 = vmatpush2.msra.mxu0 0.0
        %569 = vmatprep.subr.mxu0 0.0
        %570 = vmatpush2.msra.mxu0 0.0
        %571 = vmatprep.subr.mxu0 0.0
        %572 = vmatpush2.msra.mxu0 0.0
        %573 = vmatprep.subr.mxu0 0.0
        %574 = vmatpush2.msra.mxu0 0.0
        %575 = vmatprep.subr.mxu0 0.0
        %576 = vmatpush2.msra.mxu0 0.0
        %577 = vmatprep.subr.mxu0 0.0
        %578 = vmatpush2.msra.mxu0 0.0
        %579 = vmatprep.subr.mxu0 0.0
        %580 = vmatpush2.msra.mxu0 0.0
        %581 = vmatprep.subr.mxu0 0.0
        %582 = vmatpush2.msra.mxu0 0.0
        %583 = vmatprep.subr.mxu0 0.0
        %584 = vmatpush2.msra.mxu0 0.0
        %585 = vmatprep.subr.mxu0 0.0
        %586 = vmatpush2.msra.mxu0 0.0
        %587 = vmatprep.subr.mxu0 0.0
        %588 = vmatpush2.msra.mxu0 0.0
        %589 = vmatprep.subr.mxu0 0.0
        %590 = vmatpush2.msra.mxu0 0.0
        %591 = vmatprep.subr.mxu0 0.0
        %592 = vmatpush2.msra.mxu0 0.0
        %593 = vmatprep.subr.mxu0 0.0
        %594 = vmatpush2.msra.mxu0 0.0
        %595 = vmatprep.subr.mxu0 0.0
        %596 = vmatpush2.msra.mxu0 0.0
        %597 = vmatprep.mubr.f32.mxu0 0.0
        %598 = vmatmul.mubr.f32.gmra.mxu0 %v522
        %v599 = vpop.f32.mrf.mxu0
        %v600 = vadd.f32 0.0, %v599
        %v601 = vpop.f32.mrf.mxu0
        %602 = vmatprep.mubr.f32.mxu0 0.0
        %603 = vmatmul.mubr.f32.gmra.mxu0 %v525
        %v604 = vpop.f32.mrf.mxu0
        %v605 = vadd.f32 0.0, %v604
        %v606 = vpop.f32.mrf.mxu0
        %607 = vmatprep.mubr.f32.mxu0 0.0
        %608 = vmatmul.mubr.f32.gmra.mxu0 %v528
        %v609 = vpop.f32.mrf.mxu0
        %v610 = vadd.f32 0.0, %v609
        %v611 = vpop.f32.mrf.mxu0
        %612 = vmatprep.mubr.f32.mxu0 0.0
        %613 = vmatmul.mubr.f32.gmra.mxu0 %v531
        %v614 = vpop.f32.mrf.mxu0
        %v615 = vadd.f32 0.0, %v614
        %v616 = vpop.f32.mrf.mxu0
        %617 = vdwg.mxu0
        %v619 = vcombine.high %v513, %v513
        %v621 = vunpack.c.l.s4 1966171168
        %v622 = vunpack.c.0.s8 %v621
        %v623 = vlaneseq
        %v624 = vshrl.u32 %v623, 7
        %v625 = vsub.s32 %v622, %v624
        %v626 = vrot.slane %v513, %v625
        %v628 = vunpack.c.l.s4 1966171168
        %v629 = vunpack.c.0.s8 %v628
        %v630 = vlaneseq
        %v631 = vshrl.u32 %v630, 7
        %v632 = vsub.s32 %v629, %v631
        %v633 = vrot.slane %v619, %v632
        %v634 = vcombine.high %v626, %v626
        %v635 = vcombine.high %v633, %v633
        %v637 = vunpack.c.l.s4 1966171168
        %v638 = vunpack.c.0.s8 %v637
        %v639 = vlaneseq
        %v640 = vshrl.u32 %v639, 7
        %v641 = vsub.s32 %v638, %v640
        %v642 = vrot.slane %v626, %v641
        %v644 = vunpack.c.l.s4 1966171168
        %v645 = vunpack.c.0.s8 %v644
        %v646 = vlaneseq
        %v647 = vshrl.u32 %v646, 7
        %v648 = vsub.s32 %v645, %v647
        %v649 = vrot.slane %v633, %v648
        %v651 = vunpack.c.l.s4 1966171168
        %v652 = vunpack.c.0.s8 %v651
        %v653 = vlaneseq
        %v654 = vshrl.u32 %v653, 7
        %v655 = vsub.s32 %v652, %v654
        %v656 = vrot.slane %v634, %v655
        %v658 = vunpack.c.l.s4 1966171168
        %v659 = vunpack.c.0.s8 %v658
        %v660 = vlaneseq
        %v661 = vshrl.u32 %v660, 7
        %v662 = vsub.s32 %v659, %v661
        %v663 = vrot.slane %v635, %v662
        %v664 = vcombine.high %v642, %v642
        %v665 = vcombine.high %v649, %v649
        %v666 = vcombine.high %v656, %v656
        %v667 = vcombine.high %v663, %v663
        %v668 = vlaneseq
        %v669 = vshrl.u32 %v668, 7
        %v670 = vsub.s32 0, %v669
        %v671 = vrot.slane %v642, %v670
        %v672 = vlaneseq
        %v673 = vshrl.u32 %v672, 7
        %v674 = vsub.s32 0, %v673
        %v675 = vrot.slane %v656, %v674
        %v676 = vlaneseq
        %v677 = vshrl.u32 %v676, 7
        %v678 = vsub.s32 0, %v677
        %v679 = vrot.slane %v664, %v678
        %v680 = vlaneseq
        %v681 = vshrl.u32 %v680, 7
        %v682 = vsub.s32 0, %v681
        %v683 = vrot.slane %v666, %v682
        %v684 = vlaneseq
        %v685 = vshrl.u32 %v684, 7
        %v686 = vsub.s32 0, %v685
        %v687 = vrot.slane %v649, %v686
        %v688 = vlaneseq
        %v689 = vshrl.u32 %v688, 7
        %v690 = vsub.s32 0, %v689
        %v691 = vrot.slane %v663, %v690
        %v692 = vlaneseq
        %v693 = vshrl.u32 %v692, 7
        %v694 = vsub.s32 0, %v693
        %v695 = vrot.slane %v665, %v694
        %v696 = vlaneseq
        %v697 = vshrl.u32 %v696, 7
        %v698 = vsub.s32 0, %v697
        %v699 = vrot.slane %v667, %v698
        %v708 = vadd.f32 %v671, %v600
        %v709 = vadd.f32 %v671, %v605
        %v710 = vadd.f32 %v675, %v600
        %v711 = vadd.f32 %v675, %v605
        %v712 = vadd.f32 %v679, %v600
        %v713 = vadd.f32 %v679, %v605
        %v714 = vadd.f32 %v683, %v600
        %v715 = vadd.f32 %v683, %v605
        %v716 = vadd.f32 %v687, %v600
        %v717 = vadd.f32 %v687, %v605
        %v718 = vadd.f32 %v691, %v600
        %v719 = vadd.f32 %v691, %v605
        %v720 = vadd.f32 %v695, %v600
        %v721 = vadd.f32 %v695, %v605
        %v722 = vadd.f32 %v699, %v600
        %v723 = vadd.f32 %v699, %v605
        %v724 = vtanh.pop %v708
        %v725 = vtanh.pop %v709
        %v726 = vtanh.pop %v710
        %v727 = vtanh.pop %v711
        %v728 = vtanh.pop %v712
        %v729 = vtanh.pop %v713
        %v730 = vtanh.pop %v714
        %v731 = vtanh.pop %v715
        %v732 = vtanh.pop %v716
        %v733 = vtanh.pop %v717
        %v734 = vtanh.pop %v718
        %v735 = vtanh.pop %v719
        %v736 = vtanh.pop %v720
        %v737 = vtanh.pop %v721
        %v738 = vtanh.pop %v722
        %v739 = vtanh.pop %v723
        %v741 = vlaneseq
        %v742 = vshrl.u32 %v741, 7
        %v743 = vsub.s32 0, %v742
        %v744 = vrot.slane %v432, %v743
        %v746 = vmul.f32 %v724, %v744
        %v747 = vmul.f32 %v725, %v744
        %v748 = vmul.f32 %v726, %v744
        %v749 = vmul.f32 %v727, %v744
        %v750 = vmul.f32 %v728, %v744
        %v751 = vmul.f32 %v729, %v744
        %v752 = vmul.f32 %v730, %v744
        %v753 = vmul.f32 %v731, %v744
        %v754 = vmul.f32 %v732, %v744
        %v755 = vmul.f32 %v733, %v744
        %v756 = vmul.f32 %v734, %v744
        %v757 = vmul.f32 %v735, %v744
        %v758 = vmul.f32 %v736, %v744
        %v759 = vmul.f32 %v737, %v744
        %v760 = vmul.f32 %v738, %v744
        %v761 = vmul.f32 %v739, %v744
        %v762 = vsel %vm439, %v746, 0.0
        %763 = vadd.xlane.f32.xlu0 %v762
        %v764 = vpop.xlane.xlu0 %763
        %v765 = vsel %vm439, %v747, 0.0
        %766 = vadd.xlane.f32.xlu0 %v765
        %v767 = vpop.xlane.xlu0 %766
        %v768 = vsel %vm439, %v748, 0.0
        %769 = vadd.xlane.f32.xlu0 %v768
        %v770 = vpop.xlane.xlu0 %769
        %v771 = vsel %vm439, %v749, 0.0
        %772 = vadd.xlane.f32.xlu0 %v771
        %v773 = vpop.xlane.xlu0 %772
        %v774 = vsel %vm439, %v750, 0.0
        %775 = vadd.xlane.f32.xlu0 %v774
        %v776 = vpop.xlane.xlu0 %775
        %v777 = vsel %vm439, %v751, 0.0
        %778 = vadd.xlane.f32.xlu0 %v777
        %v779 = vpop.xlane.xlu0 %778
        %v780 = vsel %vm439, %v752, 0.0
        %781 = vadd.xlane.f32.xlu0 %v780
        %v782 = vpop.xlane.xlu0 %781
        %v783 = vsel %vm439, %v753, 0.0
        %784 = vadd.xlane.f32.xlu0 %v783
        %v785 = vpop.xlane.xlu0 %784
        %v786 = vsel %vm439, %v754, 0.0
        %787 = vadd.xlane.f32.xlu0 %v786
        %v788 = vpop.xlane.xlu0 %787
        %v789 = vsel %vm439, %v755, 0.0
        %790 = vadd.xlane.f32.xlu0 %v789
        %v791 = vpop.xlane.xlu0 %790
        %v792 = vsel %vm439, %v756, 0.0
        %793 = vadd.xlane.f32.xlu0 %v792
        %v794 = vpop.xlane.xlu0 %793
        %v795 = vsel %vm439, %v757, 0.0
        %796 = vadd.xlane.f32.xlu0 %v795
        %v797 = vpop.xlane.xlu0 %796
        %v798 = vsel %vm439, %v758, 0.0
        %799 = vadd.xlane.f32.xlu0 %v798
        %v800 = vpop.xlane.xlu0 %799
        %v801 = vsel %vm439, %v759, 0.0
        %802 = vadd.xlane.f32.xlu0 %v801
        %v803 = vpop.xlane.xlu0 %802
        %v804 = vsel %vm439, %v760, 0.0
        %805 = vadd.xlane.f32.xlu0 %v804
        %v806 = vpop.xlane.xlu0 %805
        %v807 = vsel %vm439, %v761, 0.0
        %808 = vadd.xlane.f32.xlu0 %v807
        %v809 = vpop.xlane.xlu0 %808
        %v826 = vlaneseq
        %v827 = vand.u32 %v826, 127
        %v828 = vlaneseq
        %v829 = vshrl.u32 %v828, 7
        %v830 = vsub.s32 %v827, %v829
        %v831 = vrot.slane %v764, %v830
        %v832 = vadd.s32 %v827, 4294967288
        %v833 = vlaneseq
        %v834 = vshrl.u32 %v833, 7
        %v835 = vsub.s32 %v832, %v834
        %v836 = vrot.slane %v767, %v835
        %vm837 = vcmask 130112
        %v838 = vsel %vm837, %v836, %v831
        %v839 = vlaneseq
        %v840 = vshrl.u32 %v839, 7
        %v841 = vsub.s32 %v827, %v840
        %v842 = vrot.slane %v770, %v841
        %v843 = vlaneseq
        %v844 = vshrl.u32 %v843, 7
        %v845 = vsub.s32 %v832, %v844
        %v846 = vrot.slane %v773, %v845
        %v847 = vsel %vm837, %v846, %v842
        %v848 = vlaneseq
        %v849 = vshrl.u32 %v848, 7
        %v850 = vsub.s32 %v827, %v849
        %v851 = vrot.slane %v776, %v850
        %v852 = vlaneseq
        %v853 = vshrl.u32 %v852, 7
        %v854 = vsub.s32 %v832, %v853
        %v855 = vrot.slane %v779, %v854
        %v856 = vsel %vm837, %v855, %v851
        %v857 = vlaneseq
        %v858 = vshrl.u32 %v857, 7
        %v859 = vsub.s32 %v827, %v858
        %v860 = vrot.slane %v782, %v859
        %v861 = vlaneseq
        %v862 = vshrl.u32 %v861, 7
        %v863 = vsub.s32 %v832, %v862
        %v864 = vrot.slane %v785, %v863
        %v865 = vsel %vm837, %v864, %v860
        %v866 = vlaneseq
        %v867 = vshrl.u32 %v866, 7
        %v868 = vsub.s32 %v827, %v867
        %v869 = vrot.slane %v788, %v868
        %v870 = vlaneseq
        %v871 = vshrl.u32 %v870, 7
        %v872 = vsub.s32 %v832, %v871
        %v873 = vrot.slane %v791, %v872
        %v874 = vsel %vm837, %v873, %v869
        %v875 = vlaneseq
        %v876 = vshrl.u32 %v875, 7
        %v877 = vsub.s32 %v827, %v876
        %v878 = vrot.slane %v794, %v877
        %v879 = vlaneseq
        %v880 = vshrl.u32 %v879, 7
        %v881 = vsub.s32 %v832, %v880
        %v882 = vrot.slane %v797, %v881
        %v883 = vsel %vm837, %v882, %v878
        %v884 = vlaneseq
        %v885 = vshrl.u32 %v884, 7
        %v886 = vsub.s32 %v827, %v885
        %v887 = vrot.slane %v800, %v886
        %v888 = vlaneseq
        %v889 = vshrl.u32 %v888, 7
        %v890 = vsub.s32 %v832, %v889
        %v891 = vrot.slane %v803, %v890
        %v892 = vsel %vm837, %v891, %v887
        %v893 = vlaneseq
        %v894 = vshrl.u32 %v893, 7
        %v895 = vsub.s32 %v827, %v894
        %v896 = vrot.slane %v806, %v895
        %v897 = vlaneseq
        %v898 = vshrl.u32 %v897, 7
        %v899 = vsub.s32 %v832, %v898
        %v900 = vrot.slane %v809, %v899
        %v901 = vsel %vm837, %v900, %v896
        %vm902 = vcmask 1041409
        %v903 = vsel %vm902, %v847, %v838
        %vm904 = vcmask 1042434
        %v905 = vsel %vm904, %v856, %v903
        %vm906 = vcmask 1043459
        %v907 = vsel %vm906, %v865, %v905
        %vm908 = vcmask 1044484
        %v909 = vsel %vm908, %v874, %v907
        %vm910 = vcmask 1045509
        %v911 = vsel %vm910, %v883, %v909
        %vm912 = vcmask 1046534
        %v913 = vsel %vm912, %v892, %v911
        %vm914 = vcmask 1047559
        %v915 = vsel %vm914, %v901, %v913
        %vm917 = vcmask 130048
        %v918 = vsel %vm917, %v915, -inf
        %919 = vmax.xlane.f32.xlu0 %v918
        %v920 = vpop.xlane.xlu0 %919
        %v922 = vlaneseq
        %v923 = vshrl.u32 %v922, 7
        %v924 = vsub.s32 0, %v923
        %v925 = vrot.slane %v920, %v924
        %v926 = vlaneseq
        %v927 = vshrl.u32 %v926, 7
        %v928 = vsub.s32 1, %v927
        %v929 = vrot.slane %v920, %v928
        %v930 = vlaneseq
        %v931 = vshrl.u32 %v930, 7
        %v932 = vsub.s32 2, %v931
        %v933 = vrot.slane %v920, %v932
        %v934 = vlaneseq
        %v935 = vshrl.u32 %v934, 7
        %v936 = vsub.s32 3, %v935
        %v937 = vrot.slane %v920, %v936
        %v938 = vlaneseq
        %v939 = vshrl.u32 %v938, 7
        %v940 = vsub.s32 4, %v939
        %v941 = vrot.slane %v920, %v940
        %v942 = vlaneseq
        %v943 = vshrl.u32 %v942, 7
        %v944 = vsub.s32 5, %v943
        %v945 = vrot.slane %v920, %v944
        %v946 = vlaneseq
        %v947 = vshrl.u32 %v946, 7
        %v948 = vsub.s32 6, %v947
        %v949 = vrot.slane %v920, %v948
        %v950 = vlaneseq
        %v951 = vshrl.u32 %v950, 7
        %v952 = vsub.s32 7, %v951
        %v953 = vrot.slane %v920, %v952
        %v962 = vsub.f32 %v764, %v925
        %v963 = vsub.f32 %v767, %v925
        %v964 = vsub.f32 %v770, %v929
        %v965 = vsub.f32 %v773, %v929
        %v966 = vsub.f32 %v776, %v933
        %v967 = vsub.f32 %v779, %v933
        %v968 = vsub.f32 %v782, %v937
        %v969 = vsub.f32 %v785, %v937
        %v970 = vsub.f32 %v788, %v941
        %v971 = vsub.f32 %v791, %v941
        %v972 = vsub.f32 %v794, %v945
        %v973 = vsub.f32 %v797, %v945
        %v974 = vsub.f32 %v800, %v949
        %v975 = vsub.f32 %v803, %v949
        %v976 = vsub.f32 %v806, %v953
        %v977 = vsub.f32 %v809, %v953
        %v978 = vmul.f32 %v962, 1.442695
        %v979 = vpow.pop %v978
        %v980 = vmul.f32 %v963, 1.442695
        %v981 = vpow.pop %v980
        %v982 = vmul.f32 %v964, 1.442695
        %v983 = vpow.pop %v982
        %v984 = vmul.f32 %v965, 1.442695
        %v985 = vpow.pop %v984
        %v986 = vmul.f32 %v966, 1.442695
        %v987 = vpow.pop %v986
        %v988 = vmul.f32 %v967, 1.442695
        %v989 = vpow.pop %v988
        %v990 = vmul.f32 %v968, 1.442695
        %v991 = vpow.pop %v990
        %v992 = vmul.f32 %v969, 1.442695
        %v993 = vpow.pop %v992
        %v994 = vmul.f32 %v970, 1.442695
        %v995 = vpow.pop %v994
        %v996 = vmul.f32 %v971, 1.442695
        %v997 = vpow.pop %v996
        %v998 = vmul.f32 %v972, 1.442695
        %v999 = vpow.pop %v998
        %v1000 = vmul.f32 %v973, 1.442695
        %v1001 = vpow.pop %v1000
        %v1002 = vmul.f32 %v974, 1.442695
        %v1003 = vpow.pop %v1002
        %v1004 = vmul.f32 %v975, 1.442695
        %v1005 = vpow.pop %v1004
        %v1006 = vmul.f32 %v976, 1.442695
        %v1007 = vpow.pop %v1006
        %v1008 = vmul.f32 %v977, 1.442695
        %v1009 = vpow.pop %v1008
        %1026 = vset.pattern.permute.xlu0 0
        %1027 = vperm.xlu0 %1026, %v979
        %v1028 = vpop.permute.xlu0 %1027
        %1029 = vset.pattern.permute.xlu0 0
        %1030 = vperm.xlu0 %1029, %v981
        %v1031 = vpop.permute.xlu0 %1030
        %1032 = vset.pattern.permute.xlu0 0
        %1033 = vperm.xlu0 %1032, %v983
        %v1034 = vpop.permute.xlu0 %1033
        %1035 = vset.pattern.permute.xlu0 0
        %1036 = vperm.xlu0 %1035, %v985
        %v1037 = vpop.permute.xlu0 %1036
        %1038 = vset.pattern.permute.xlu0 0
        %1039 = vperm.xlu0 %1038, %v987
        %v1040 = vpop.permute.xlu0 %1039
        %1041 = vset.pattern.permute.xlu0 0
        %1042 = vperm.xlu0 %1041, %v989
        %v1043 = vpop.permute.xlu0 %1042
        %1044 = vset.pattern.permute.xlu0 0
        %1045 = vperm.xlu0 %1044, %v991
        %v1046 = vpop.permute.xlu0 %1045
        %1047 = vset.pattern.permute.xlu0 0
        %1048 = vperm.xlu0 %1047, %v993
        %v1049 = vpop.permute.xlu0 %1048
        %1050 = vset.pattern.permute.xlu0 0
        %1051 = vperm.xlu0 %1050, %v995
        %v1052 = vpop.permute.xlu0 %1051
        %1053 = vset.pattern.permute.xlu0 0
        %1054 = vperm.xlu0 %1053, %v997
        %v1055 = vpop.permute.xlu0 %1054
        %1056 = vset.pattern.permute.xlu0 0
        %1057 = vperm.xlu0 %1056, %v999
        %v1058 = vpop.permute.xlu0 %1057
        %1059 = vset.pattern.permute.xlu0 0
        %1060 = vperm.xlu0 %1059, %v1001
        %v1061 = vpop.permute.xlu0 %1060
        %1062 = vset.pattern.permute.xlu0 0
        %1063 = vperm.xlu0 %1062, %v1003
        %v1064 = vpop.permute.xlu0 %1063
        %1065 = vset.pattern.permute.xlu0 0
        %1066 = vperm.xlu0 %1065, %v1005
        %v1067 = vpop.permute.xlu0 %1066
        %1068 = vset.pattern.permute.xlu0 0
        %1069 = vperm.xlu0 %1068, %v1007
        %v1070 = vpop.permute.xlu0 %1069
        %1071 = vset.pattern.permute.xlu0 0
        %1072 = vperm.xlu0 %1071, %v1009
        %v1073 = vpop.permute.xlu0 %1072
        %v1074 = vlaneseq
        %v1075 = vshrl.u32 %v1074, 7
        %v1076 = vsub.s32 %v827, %v1075
        %v1077 = vrot.slane %v1028, %v1076
        %v1078 = vlaneseq
        %v1079 = vshrl.u32 %v1078, 7
        %v1080 = vsub.s32 %v832, %v1079
        %v1081 = vrot.slane %v1031, %v1080
        %v1082 = vsel %vm837, %v1081, %v1077
        %v1083 = vlaneseq
        %v1084 = vshrl.u32 %v1083, 7
        %v1085 = vsub.s32 %v827, %v1084
        %v1086 = vrot.slane %v1034, %v1085
        %v1087 = vlaneseq
        %v1088 = vshrl.u32 %v1087, 7
        %v1089 = vsub.s32 %v832, %v1088
        %v1090 = vrot.slane %v1037, %v1089
        %v1091 = vsel %vm837, %v1090, %v1086
        %v1092 = vlaneseq
        %v1093 = vshrl.u32 %v1092, 7
        %v1094 = vsub.s32 %v827, %v1093
        %v1095 = vrot.slane %v1040, %v1094
        %v1096 = vlaneseq
        %v1097 = vshrl.u32 %v1096, 7
        %v1098 = vsub.s32 %v832, %v1097
        %v1099 = vrot.slane %v1043, %v1098
        %v1100 = vsel %vm837, %v1099, %v1095
        %v1101 = vlaneseq
        %v1102 = vshrl.u32 %v1101, 7
        %v1103 = vsub.s32 %v827, %v1102
        %v1104 = vrot.slane %v1046, %v1103
        %v1105 = vlaneseq
        %v1106 = vshrl.u32 %v1105, 7
        %v1107 = vsub.s32 %v832, %v1106
        %v1108 = vrot.slane %v1049, %v1107
        %v1109 = vsel %vm837, %v1108, %v1104
        %v1110 = vlaneseq
        %v1111 = vshrl.u32 %v1110, 7
        %v1112 = vsub.s32 %v827, %v1111
        %v1113 = vrot.slane %v1052, %v1112
        %v1114 = vlaneseq
        %v1115 = vshrl.u32 %v1114, 7
        %v1116 = vsub.s32 %v832, %v1115
        %v1117 = vrot.slane %v1055, %v1116
        %v1118 = vsel %vm837, %v1117, %v1113
        %v1119 = vlaneseq
        %v1120 = vshrl.u32 %v1119, 7
        %v1121 = vsub.s32 %v827, %v1120
        %v1122 = vrot.slane %v1058, %v1121
        %v1123 = vlaneseq
        %v1124 = vshrl.u32 %v1123, 7
        %v1125 = vsub.s32 %v832, %v1124
        %v1126 = vrot.slane %v1061, %v1125
        %v1127 = vsel %vm837, %v1126, %v1122
        %v1128 = vlaneseq
        %v1129 = vshrl.u32 %v1128, 7
        %v1130 = vsub.s32 %v827, %v1129
        %v1131 = vrot.slane %v1064, %v1130
        %v1132 = vlaneseq
        %v1133 = vshrl.u32 %v1132, 7
        %v1134 = vsub.s32 %v832, %v1133
        %v1135 = vrot.slane %v1067, %v1134
        %v1136 = vsel %vm837, %v1135, %v1131
        %v1137 = vlaneseq
        %v1138 = vshrl.u32 %v1137, 7
        %v1139 = vsub.s32 %v827, %v1138
        %v1140 = vrot.slane %v1070, %v1139
        %v1141 = vlaneseq
        %v1142 = vshrl.u32 %v1141, 7
        %v1143 = vsub.s32 %v832, %v1142
        %v1144 = vrot.slane %v1073, %v1143
        %v1145 = vsel %vm837, %v1144, %v1140
        %v1146 = vsel %vm902, %v1091, %v1082
        %v1147 = vsel %vm904, %v1100, %v1146
        %v1148 = vsel %vm906, %v1109, %v1147
        %v1149 = vsel %vm908, %v1118, %v1148
        %v1150 = vsel %vm910, %v1127, %v1149
        %v1151 = vsel %vm912, %v1136, %v1150
        %v1152 = vsel %vm914, %v1145, %v1151
        %v1154 = vsel %vm917, %v1152, 0.0
        %1155 = vadd.xlane.f32.xlu0 %v1154
        %v1156 = vpop.xlane.xlu0 %1155
        %v1158 = vlaneseq
        %v1159 = vshrl.u32 %v1158, 7
        %v1160 = vsub.s32 0, %v1159
        %v1161 = vrot.slane %v1156, %v1160
        %v1162 = vlaneseq
        %v1163 = vshrl.u32 %v1162, 7
        %v1164 = vsub.s32 1, %v1163
        %v1165 = vrot.slane %v1156, %v1164
        %v1166 = vlaneseq
        %v1167 = vshrl.u32 %v1166, 7
        %v1168 = vsub.s32 2, %v1167
        %v1169 = vrot.slane %v1156, %v1168
        %v1170 = vlaneseq
        %v1171 = vshrl.u32 %v1170, 7
        %v1172 = vsub.s32 3, %v1171
        %v1173 = vrot.slane %v1156, %v1172
        %v1174 = vlaneseq
        %v1175 = vshrl.u32 %v1174, 7
        %v1176 = vsub.s32 4, %v1175
        %v1177 = vrot.slane %v1156, %v1176
        %v1178 = vlaneseq
        %v1179 = vshrl.u32 %v1178, 7
        %v1180 = vsub.s32 5, %v1179
        %v1181 = vrot.slane %v1156, %v1180
        %v1182 = vlaneseq
        %v1183 = vshrl.u32 %v1182, 7
        %v1184 = vsub.s32 6, %v1183
        %v1185 = vrot.slane %v1156, %v1184
        %v1186 = vlaneseq
        %v1187 = vshrl.u32 %v1186, 7
        %v1188 = vsub.s32 7, %v1187
        %v1189 = vrot.slane %v1156, %v1188
        %v1198 = vrcp.pop %v1161
        %v1199 = vmul.f32 %v979, %v1198
        %v1200 = vmul.f32 %v981, %v1198
        %v1201 = vrcp.pop %v1165
        %v1202 = vmul.f32 %v983, %v1201
        %v1203 = vmul.f32 %v985, %v1201
        %v1204 = vrcp.pop %v1169
        %v1205 = vmul.f32 %v987, %v1204
        %v1206 = vmul.f32 %v989, %v1204
        %v1207 = vrcp.pop %v1173
        %v1208 = vmul.f32 %v991, %v1207
        %v1209 = vmul.f32 %v993, %v1207
        %v1210 = vrcp.pop %v1177
        %v1211 = vmul.f32 %v995, %v1210
        %v1212 = vmul.f32 %v997, %v1210
        %v1213 = vrcp.pop %v1181
        %v1214 = vmul.f32 %v999, %v1213
        %v1215 = vmul.f32 %v1001, %v1213
        %v1216 = vrcp.pop %v1185
        %v1217 = vmul.f32 %v1003, %v1216
        %v1218 = vmul.f32 %v1005, %v1216
        %v1219 = vrcp.pop %v1189
        %v1220 = vmul.f32 %v1007, %v1219
        %v1221 = vmul.f32 %v1009, %v1219
        %1238 = vset.pattern.permute.xlu0 0
        %1239 = vperm.xlu0 %1238, %v1199
        %v1240 = vpop.permute.xlu0 %1239
        %1241 = vset.pattern.permute.xlu0 0
        %1242 = vperm.xlu0 %1241, %v1200
        %v1243 = vpop.permute.xlu0 %1242
        %1244 = vset.pattern.permute.xlu0 0
        %1245 = vperm.xlu0 %1244, %v1202
        %v1246 = vpop.permute.xlu0 %1245
        %1247 = vset.pattern.permute.xlu0 0
        %1248 = vperm.xlu0 %1247, %v1203
        %v1249 = vpop.permute.xlu0 %1248
        %1250 = vset.pattern.permute.xlu0 0
        %1251 = vperm.xlu0 %1250, %v1205
        %v1252 = vpop.permute.xlu0 %1251
        %1253 = vset.pattern.permute.xlu0 0
        %1254 = vperm.xlu0 %1253, %v1206
        %v1255 = vpop.permute.xlu0 %1254
        %1256 = vset.pattern.permute.xlu0 0
        %1257 = vperm.xlu0 %1256, %v1208
        %v1258 = vpop.permute.xlu0 %1257
        %1259 = vset.pattern.permute.xlu0 0
        %1260 = vperm.xlu0 %1259, %v1209
        %v1261 = vpop.permute.xlu0 %1260
        %1262 = vset.pattern.permute.xlu0 0
        %1263 = vperm.xlu0 %1262, %v1211
        %v1264 = vpop.permute.xlu0 %1263
        %1265 = vset.pattern.permute.xlu0 0
        %1266 = vperm.xlu0 %1265, %v1212
        %v1267 = vpop.permute.xlu0 %1266
        %1268 = vset.pattern.permute.xlu0 0
        %1269 = vperm.xlu0 %1268, %v1214
        %v1270 = vpop.permute.xlu0 %1269
        %1271 = vset.pattern.permute.xlu0 0
        %1272 = vperm.xlu0 %1271, %v1215
        %v1273 = vpop.permute.xlu0 %1272
        %1274 = vset.pattern.permute.xlu0 0
        %1275 = vperm.xlu0 %1274, %v1217
        %v1276 = vpop.permute.xlu0 %1275
        %1277 = vset.pattern.permute.xlu0 0
        %1278 = vperm.xlu0 %1277, %v1218
        %v1279 = vpop.permute.xlu0 %1278
        %1280 = vset.pattern.permute.xlu0 0
        %1281 = vperm.xlu0 %1280, %v1220
        %v1282 = vpop.permute.xlu0 %1281
        %1283 = vset.pattern.permute.xlu0 0
        %1284 = vperm.xlu0 %1283, %v1221
        %v1285 = vpop.permute.xlu0 %1284
        %v1286 = vlaneseq
        %v1287 = vshrl.u32 %v1286, 7
        %v1288 = vsub.s32 %v827, %v1287
        %v1289 = vrot.slane %v1240, %v1288
        %v1290 = vlaneseq
        %v1291 = vshrl.u32 %v1290, 7
        %v1292 = vsub.s32 %v832, %v1291
        %v1293 = vrot.slane %v1243, %v1292
        %v1294 = vsel %vm837, %v1293, %v1289
        %v1295 = vlaneseq
        %v1296 = vshrl.u32 %v1295, 7
        %v1297 = vsub.s32 %v827, %v1296
        %v1298 = vrot.slane %v1246, %v1297
        %v1299 = vlaneseq
        %v1300 = vshrl.u32 %v1299, 7
        %v1301 = vsub.s32 %v832, %v1300
        %v1302 = vrot.slane %v1249, %v1301
        %v1303 = vsel %vm837, %v1302, %v1298
        %v1304 = vlaneseq
        %v1305 = vshrl.u32 %v1304, 7
        %v1306 = vsub.s32 %v827, %v1305
        %v1307 = vrot.slane %v1252, %v1306
        %v1308 = vlaneseq
        %v1309 = vshrl.u32 %v1308, 7
        %v1310 = vsub.s32 %v832, %v1309
        %v1311 = vrot.slane %v1255, %v1310
        %v1312 = vsel %vm837, %v1311, %v1307
        %v1313 = vlaneseq
        %v1314 = vshrl.u32 %v1313, 7
        %v1315 = vsub.s32 %v827, %v1314
        %v1316 = vrot.slane %v1258, %v1315
        %v1317 = vlaneseq
        %v1318 = vshrl.u32 %v1317, 7
        %v1319 = vsub.s32 %v832, %v1318
        %v1320 = vrot.slane %v1261, %v1319
        %v1321 = vsel %vm837, %v1320, %v1316
        %v1322 = vlaneseq
        %v1323 = vshrl.u32 %v1322, 7
        %v1324 = vsub.s32 %v827, %v1323
        %v1325 = vrot.slane %v1264, %v1324
        %v1326 = vlaneseq
        %v1327 = vshrl.u32 %v1326, 7
        %v1328 = vsub.s32 %v832, %v1327
        %v1329 = vrot.slane %v1267, %v1328
        %v1330 = vsel %vm837, %v1329, %v1325
        %v1331 = vlaneseq
        %v1332 = vshrl.u32 %v1331, 7
        %v1333 = vsub.s32 %v827, %v1332
        %v1334 = vrot.slane %v1270, %v1333
        %v1335 = vlaneseq
        %v1336 = vshrl.u32 %v1335, 7
        %v1337 = vsub.s32 %v832, %v1336
        %v1338 = vrot.slane %v1273, %v1337
        %v1339 = vsel %vm837, %v1338, %v1334
        %v1340 = vlaneseq
        %v1341 = vshrl.u32 %v1340, 7
        %v1342 = vsub.s32 %v827, %v1341
        %v1343 = vrot.slane %v1276, %v1342
        %v1344 = vlaneseq
        %v1345 = vshrl.u32 %v1344, 7
        %v1346 = vsub.s32 %v832, %v1345
        %v1347 = vrot.slane %v1279, %v1346
        %v1348 = vsel %vm837, %v1347, %v1343
        %v1349 = vlaneseq
        %v1350 = vshrl.u32 %v1349, 7
        %v1351 = vsub.s32 %v827, %v1350
        %v1352 = vrot.slane %v1282, %v1351
        %v1353 = vlaneseq
        %v1354 = vshrl.u32 %v1353, 7
        %v1355 = vsub.s32 %v832, %v1354
        %v1356 = vrot.slane %v1285, %v1355
        %v1357 = vsel %vm837, %v1356, %v1352
        %v1358 = vsel %vm902, %v1303, %v1294
        %v1359 = vsel %vm904, %v1312, %v1358
        %v1360 = vsel %vm906, %v1321, %v1359
        %v1361 = vsel %vm908, %v1330, %v1360
        %v1362 = vsel %vm910, %v1339, %v1361
        %v1363 = vsel %vm912, %v1348, %v1362
        %v1364 = vsel %vm914, %v1357, %v1363
        %v1365 = vsel %vm917, %v1364, 0
        %1367 = vmatprep.subr.mxu0 0.0
        %1368 = vmatpush1.msra.mxu0 0.0
        %1369 = vmatprep.subr.mxu0 0.0
        %1370 = vmatpush1.msra.mxu0 0.0
        %1371 = vmatprep.subr.mxu0 0.0
        %1372 = vmatpush1.msra.mxu0 0.0
        %1373 = vmatprep.subr.mxu0 0.0
        %1374 = vmatpush1.msra.mxu0 0.0
        %1375 = vmatprep.subr.mxu0 0.0
        %1376 = vmatpush1.msra.mxu0 0.0
        %1377 = vmatprep.subr.mxu0 0.0
        %1378 = vmatpush1.msra.mxu0 0.0
        %1379 = vmatprep.subr.mxu0 0.0
        %1380 = vmatpush1.msra.mxu0 0.0
        %1381 = vmatprep.subr.mxu0 0.0
        %1382 = vmatpush1.msra.mxu0 0.0
        %1383 = vmatprep.subr.mxu0 0.0
        %1384 = vmatpush1.msra.mxu0 0.0
        %1385 = vmatprep.subr.mxu0 0.0
        %1386 = vmatpush1.msra.mxu0 0.0
        %1387 = vmatprep.subr.mxu0 0.0
        %1388 = vmatpush1.msra.mxu0 0.0
        %1389 = vmatprep.subr.mxu0 0.0
        %1390 = vmatpush1.msra.mxu0 0.0
        %1391 = vmatprep.subr.mxu0 0.0
        %1392 = vmatpush1.msra.mxu0 0.0
        %1393 = vmatprep.subr.mxu0 0.0
        %1394 = vmatpush1.msra.mxu0 0.0
        %1395 = vmatprep.subr.mxu0 0.0
        %1396 = vmatpush1.msra.mxu0 %v420
        %1397 = vmatprep.subr.mxu0 0.0
        %1398 = vmatpush1.msra.mxu0 %v419
        %1399 = vmatprep.subr.mxu0 0.0
        %1400 = vmatpush2.msra.mxu0 0.0
        %1401 = vmatprep.subr.mxu0 0.0
        %1402 = vmatpush2.msra.mxu0 0.0
        %1403 = vmatprep.subr.mxu0 0.0
        %1404 = vmatpush2.msra.mxu0 0.0
        %1405 = vmatprep.subr.mxu0 0.0
        %1406 = vmatpush2.msra.mxu0 0.0
        %1407 = vmatprep.subr.mxu0 0.0
        %1408 = vmatpush2.msra.mxu0 0.0
        %1409 = vmatprep.subr.mxu0 0.0
        %1410 = vmatpush2.msra.mxu0 0.0
        %1411 = vmatprep.subr.mxu0 0.0
        %1412 = vmatpush2.msra.mxu0 0.0
        %1413 = vmatprep.subr.mxu0 0.0
        %1414 = vmatpush2.msra.mxu0 0.0
        %1415 = vmatprep.subr.mxu0 0.0
        %1416 = vmatpush2.msra.mxu0 0.0
        %1417 = vmatprep.subr.mxu0 0.0
        %1418 = vmatpush2.msra.mxu0 0.0
        %1419 = vmatprep.subr.mxu0 0.0
        %1420 = vmatpush2.msra.mxu0 0.0
        %1421 = vmatprep.subr.mxu0 0.0
        %1422 = vmatpush2.msra.mxu0 0.0
        %1423 = vmatprep.subr.mxu0 0.0
        %1424 = vmatpush2.msra.mxu0 0.0
        %1425 = vmatprep.subr.mxu0 0.0
        %1426 = vmatpush2.msra.mxu0 0.0
        %1427 = vmatprep.subr.mxu0 0.0
        %1428 = vmatpush2.msra.mxu0 0.0
        %1429 = vmatprep.subr.mxu0 0.0
        %1430 = vmatpush2.msra.mxu0 0.0
        %1431 = vmatprep.mubr.f32.mxu0 0.0
        %1432 = vmatmul.mubr.f32.gmra.mxu0 %v1365
        %v1433 = vpop.f32.mrf.mxu0
        %v1434 = vadd.f32 0.0, %v1433
        %v1435 = vpop.f32.mrf.mxu0
        %1436 = vdwg.mxu0
        %1437 = vst.msk [vmem:[%s397] sm:$0xff] %vm439, %v1434
        %1439 = vst.msk [vmem:[%s404] sm:$0xff] %vm917, %v1364
        %1440 = vst.msk [vmem:[%s411] sm:$0xff] %vm917, %v915
        %v1442 = vcombine.high %v518, %v518
        %v1444 = vunpack.c.l.s4 1966171168
        %v1445 = vunpack.c.0.s8 %v1444
        %v1446 = vlaneseq
        %v1447 = vshrl.u32 %v1446, 7
        %v1448 = vsub.s32 %v1445, %v1447
        %v1449 = vrot.slane %v518, %v1448
        %v1451 = vunpack.c.l.s4 1966171168
        %v1452 = vunpack.c.0.s8 %v1451
        %v1453 = vlaneseq
        %v1454 = vshrl.u32 %v1453, 7
        %v1455 = vsub.s32 %v1452, %v1454
        %v1456 = vrot.slane %v1442, %v1455
        %v1457 = vcombine.high %v1449, %v1449
        %v1458 = vcombine.high %v1456, %v1456
        %v1460 = vunpack.c.l.s4 1966171168
        %v1461 = vunpack.c.0.s8 %v1460
        %v1462 = vlaneseq
        %v1463 = vshrl.u32 %v1462, 7
        %v1464 = vsub.s32 %v1461, %v1463
        %v1465 = vrot.slane %v1449, %v1464
        %v1467 = vunpack.c.l.s4 1966171168
        %v1468 = vunpack.c.0.s8 %v1467
        %v1469 = vlaneseq
        %v1470 = vshrl.u32 %v1469, 7
        %v1471 = vsub.s32 %v1468, %v1470
        %v1472 = vrot.slane %v1456, %v1471
        %v1474 = vunpack.c.l.s4 1966171168
        %v1475 = vunpack.c.0.s8 %v1474
        %v1476 = vlaneseq
        %v1477 = vshrl.u32 %v1476, 7
        %v1478 = vsub.s32 %v1475, %v1477
        %v1479 = vrot.slane %v1457, %v1478
        %v1481 = vunpack.c.l.s4 1966171168
        %v1482 = vunpack.c.0.s8 %v1481
        %v1483 = vlaneseq
        %v1484 = vshrl.u32 %v1483, 7
        %v1485 = vsub.s32 %v1482, %v1484
        %v1486 = vrot.slane %v1458, %v1485
        %v1487 = vcombine.high %v1465, %v1465
        %v1488 = vcombine.high %v1472, %v1472
        %v1489 = vcombine.high %v1479, %v1479
        %v1490 = vcombine.high %v1486, %v1486
        %v1491 = vlaneseq
        %v1492 = vshrl.u32 %v1491, 7
        %v1493 = vsub.s32 0, %v1492
        %v1494 = vrot.slane %v1465, %v1493
        %v1495 = vlaneseq
        %v1496 = vshrl.u32 %v1495, 7
        %v1497 = vsub.s32 0, %v1496
        %v1498 = vrot.slane %v1479, %v1497
        %v1499 = vlaneseq
        %v1500 = vshrl.u32 %v1499, 7
        %v1501 = vsub.s32 0, %v1500
        %v1502 = vrot.slane %v1487, %v1501
        %v1503 = vlaneseq
        %v1504 = vshrl.u32 %v1503, 7
        %v1505 = vsub.s32 0, %v1504
        %v1506 = vrot.slane %v1489, %v1505
        %v1507 = vlaneseq
        %v1508 = vshrl.u32 %v1507, 7
        %v1509 = vsub.s32 0, %v1508
        %v1510 = vrot.slane %v1472, %v1509
        %v1511 = vlaneseq
        %v1512 = vshrl.u32 %v1511, 7
        %v1513 = vsub.s32 0, %v1512
        %v1514 = vrot.slane %v1486, %v1513
        %v1515 = vlaneseq
        %v1516 = vshrl.u32 %v1515, 7
        %v1517 = vsub.s32 0, %v1516
        %v1518 = vrot.slane %v1488, %v1517
        %v1519 = vlaneseq
        %v1520 = vshrl.u32 %v1519, 7
        %v1521 = vsub.s32 0, %v1520
        %v1522 = vrot.slane %v1490, %v1521
        %v1531 = vadd.f32 %v1494, %v610
        %v1532 = vadd.f32 %v1494, %v615
        %v1533 = vadd.f32 %v1498, %v610
        %v1534 = vadd.f32 %v1498, %v615
        %v1535 = vadd.f32 %v1502, %v610
        %v1536 = vadd.f32 %v1502, %v615
        %v1537 = vadd.f32 %v1506, %v610
        %v1538 = vadd.f32 %v1506, %v615
        %v1539 = vadd.f32 %v1510, %v610
        %v1540 = vadd.f32 %v1510, %v615
        %v1541 = vadd.f32 %v1514, %v610
        %v1542 = vadd.f32 %v1514, %v615
        %v1543 = vadd.f32 %v1518, %v610
        %v1544 = vadd.f32 %v1518, %v615
        %v1545 = vadd.f32 %v1522, %v610
        %v1546 = vadd.f32 %v1522, %v615
        %v1547 = vtanh.pop %v1531
        %v1548 = vtanh.pop %v1532
        %v1549 = vtanh.pop %v1533
        %v1550 = vtanh.pop %v1534
        %v1551 = vtanh.pop %v1535
        %v1552 = vtanh.pop %v1536
        %v1553 = vtanh.pop %v1537
        %v1554 = vtanh.pop %v1538
        %v1555 = vtanh.pop %v1539
        %v1556 = vtanh.pop %v1540
        %v1557 = vtanh.pop %v1541
        %v1558 = vtanh.pop %v1542
        %v1559 = vtanh.pop %v1543
        %v1560 = vtanh.pop %v1544
        %v1561 = vtanh.pop %v1545
        %v1562 = vtanh.pop %v1546
        %v1563 = vmul.f32 %v1547, %v744
        %v1564 = vmul.f32 %v1548, %v744
        %v1565 = vmul.f32 %v1549, %v744
        %v1566 = vmul.f32 %v1550, %v744
        %v1567 = vmul.f32 %v1551, %v744
        %v1568 = vmul.f32 %v1552, %v744
        %v1569 = vmul.f32 %v1553, %v744
        %v1570 = vmul.f32 %v1554, %v744
        %v1571 = vmul.f32 %v1555, %v744
        %v1572 = vmul.f32 %v1556, %v744
        %v1573 = vmul.f32 %v1557, %v744
        %v1574 = vmul.f32 %v1558, %v744
        %v1575 = vmul.f32 %v1559, %v744
        %v1576 = vmul.f32 %v1560, %v744
        %v1577 = vmul.f32 %v1561, %v744
        %v1578 = vmul.f32 %v1562, %v744
        %v1579 = vsel %vm439, %v1563, 0.0
        %1580 = vadd.xlane.f32.xlu0 %v1579
        %v1581 = vpop.xlane.xlu0 %1580
        %v1582 = vsel %vm439, %v1564, 0.0
        %1583 = vadd.xlane.f32.xlu0 %v1582
        %v1584 = vpop.xlane.xlu0 %1583
        %v1585 = vsel %vm439, %v1565, 0.0
        %1586 = vadd.xlane.f32.xlu0 %v1585
        %v1587 = vpop.xlane.xlu0 %1586
        %v1588 = vsel %vm439, %v1566, 0.0
        %1589 = vadd.xlane.f32.xlu0 %v1588
        %v1590 = vpop.xlane.xlu0 %1589
        %v1591 = vsel %vm439, %v1567, 0.0
        %1592 = vadd.xlane.f32.xlu0 %v1591
        %v1593 = vpop.xlane.xlu0 %1592
        %v1594 = vsel %vm439, %v1568, 0.0
        %1595 = vadd.xlane.f32.xlu0 %v1594
        %v1596 = vpop.xlane.xlu0 %1595
        %v1597 = vsel %vm439, %v1569, 0.0
        %1598 = vadd.xlane.f32.xlu0 %v1597
        %v1599 = vpop.xlane.xlu0 %1598
        %v1600 = vsel %vm439, %v1570, 0.0
        %1601 = vadd.xlane.f32.xlu0 %v1600
        %v1602 = vpop.xlane.xlu0 %1601
        %v1603 = vsel %vm439, %v1571, 0.0
        %1604 = vadd.xlane.f32.xlu0 %v1603
        %v1605 = vpop.xlane.xlu0 %1604
        %v1606 = vsel %vm439, %v1572, 0.0
        %1607 = vadd.xlane.f32.xlu0 %v1606
        %v1608 = vpop.xlane.xlu0 %1607
        %v1609 = vsel %vm439, %v1573, 0.0
        %1610 = vadd.xlane.f32.xlu0 %v1609
        %v1611 = vpop.xlane.xlu0 %1610
        %v1612 = vsel %vm439, %v1574, 0.0
        %1613 = vadd.xlane.f32.xlu0 %v1612
        %v1614 = vpop.xlane.xlu0 %1613
        %v1615 = vsel %vm439, %v1575, 0.0
        %1616 = vadd.xlane.f32.xlu0 %v1615
        %v1617 = vpop.xlane.xlu0 %1616
        %v1618 = vsel %vm439, %v1576, 0.0
        %1619 = vadd.xlane.f32.xlu0 %v1618
        %v1620 = vpop.xlane.xlu0 %1619
        %v1621 = vsel %vm439, %v1577, 0.0
        %1622 = vadd.xlane.f32.xlu0 %v1621
        %v1623 = vpop.xlane.xlu0 %1622
        %v1624 = vsel %vm439, %v1578, 0.0
        %1625 = vadd.xlane.f32.xlu0 %v1624
        %v1626 = vpop.xlane.xlu0 %1625
        %v1643 = vlaneseq
        %v1644 = vshrl.u32 %v1643, 7
        %v1645 = vsub.s32 %v827, %v1644
        %v1646 = vrot.slane %v1581, %v1645
        %v1647 = vlaneseq
        %v1648 = vshrl.u32 %v1647, 7
        %v1649 = vsub.s32 %v832, %v1648
        %v1650 = vrot.slane %v1584, %v1649
        %v1651 = vsel %vm837, %v1650, %v1646
        %v1652 = vlaneseq
        %v1653 = vshrl.u32 %v1652, 7
        %v1654 = vsub.s32 %v827, %v1653
        %v1655 = vrot.slane %v1587, %v1654
        %v1656 = vlaneseq
        %v1657 = vshrl.u32 %v1656, 7
        %v1658 = vsub.s32 %v832, %v1657
        %v1659 = vrot.slane %v1590, %v1658
        %v1660 = vsel %vm837, %v1659, %v1655
        %v1661 = vlaneseq
        %v1662 = vshrl.u32 %v1661, 7
        %v1663 = vsub.s32 %v827, %v1662
        %v1664 = vrot.slane %v1593, %v1663
        %v1665 = vlaneseq
        %v1666 = vshrl.u32 %v1665, 7
        %v1667 = vsub.s32 %v832, %v1666
        %v1668 = vrot.slane %v1596, %v1667
        %v1669 = vsel %vm837, %v1668, %v1664
        %v1670 = vlaneseq
        %v1671 = vshrl.u32 %v1670, 7
        %v1672 = vsub.s32 %v827, %v1671
        %v1673 = vrot.slane %v1599, %v1672
        %v1674 = vlaneseq
        %v1675 = vshrl.u32 %v1674, 7
        %v1676 = vsub.s32 %v832, %v1675
        %v1677 = vrot.slane %v1602, %v1676
        %v1678 = vsel %vm837, %v1677, %v1673
        %v1679 = vlaneseq
        %v1680 = vshrl.u32 %v1679, 7
        %v1681 = vsub.s32 %v827, %v1680
        %v1682 = vrot.slane %v1605, %v1681
        %v1683 = vlaneseq
        %v1684 = vshrl.u32 %v1683, 7
        %v1685 = vsub.s32 %v832, %v1684
        %v1686 = vrot.slane %v1608, %v1685
        %v1687 = vsel %vm837, %v1686, %v1682
        %v1688 = vlaneseq
        %v1689 = vshrl.u32 %v1688, 7
        %v1690 = vsub.s32 %v827, %v1689
        %v1691 = vrot.slane %v1611, %v1690
        %v1692 = vlaneseq
        %v1693 = vshrl.u32 %v1692, 7
        %v1694 = vsub.s32 %v832, %v1693
        %v1695 = vrot.slane %v1614, %v1694
        %v1696 = vsel %vm837, %v1695, %v1691
        %v1697 = vlaneseq
        %v1698 = vshrl.u32 %v1697, 7
        %v1699 = vsub.s32 %v827, %v1698
        %v1700 = vrot.slane %v1617, %v1699
        %v1701 = vlaneseq
        %v1702 = vshrl.u32 %v1701, 7
        %v1703 = vsub.s32 %v832, %v1702
        %v1704 = vrot.slane %v1620, %v1703
        %v1705 = vsel %vm837, %v1704, %v1700
        %v1706 = vlaneseq
        %v1707 = vshrl.u32 %v1706, 7
        %v1708 = vsub.s32 %v827, %v1707
        %v1709 = vrot.slane %v1623, %v1708
        %v1710 = vlaneseq
        %v1711 = vshrl.u32 %v1710, 7
        %v1712 = vsub.s32 %v832, %v1711
        %v1713 = vrot.slane %v1626, %v1712
        %v1714 = vsel %vm837, %v1713, %v1709
        %v1715 = vsel %vm902, %v1660, %v1651
        %v1716 = vsel %vm904, %v1669, %v1715
        %v1717 = vsel %vm906, %v1678, %v1716
        %v1718 = vsel %vm908, %v1687, %v1717
        %v1719 = vsel %vm910, %v1696, %v1718
        %v1720 = vsel %vm912, %v1705, %v1719
        %v1721 = vsel %vm914, %v1714, %v1720
        %v1723 = vsel %vm917, %v1721, -inf
        %1724 = vmax.xlane.f32.xlu0 %v1723
        %v1725 = vpop.xlane.xlu0 %1724
        %v1727 = vlaneseq
        %v1728 = vshrl.u32 %v1727, 7
        %v1729 = vsub.s32 0, %v1728
        %v1730 = vrot.slane %v1725, %v1729
        %v1731 = vlaneseq
        %v1732 = vshrl.u32 %v1731, 7
        %v1733 = vsub.s32 1, %v1732
        %v1734 = vrot.slane %v1725, %v1733
        %v1735 = vlaneseq
        %v1736 = vshrl.u32 %v1735, 7
        %v1737 = vsub.s32 2, %v1736
        %v1738 = vrot.slane %v1725, %v1737
        %v1739 = vlaneseq
        %v1740 = vshrl.u32 %v1739, 7
        %v1741 = vsub.s32 3, %v1740
        %v1742 = vrot.slane %v1725, %v1741
        %v1743 = vlaneseq
        %v1744 = vshrl.u32 %v1743, 7
        %v1745 = vsub.s32 4, %v1744
        %v1746 = vrot.slane %v1725, %v1745
        %v1747 = vlaneseq
        %v1748 = vshrl.u32 %v1747, 7
        %v1749 = vsub.s32 5, %v1748
        %v1750 = vrot.slane %v1725, %v1749
        %v1751 = vlaneseq
        %v1752 = vshrl.u32 %v1751, 7
        %v1753 = vsub.s32 6, %v1752
        %v1754 = vrot.slane %v1725, %v1753
        %v1755 = vlaneseq
        %v1756 = vshrl.u32 %v1755, 7
        %v1757 = vsub.s32 7, %v1756
        %v1758 = vrot.slane %v1725, %v1757
        %v1767 = vsub.f32 %v1581, %v1730
        %v1768 = vsub.f32 %v1584, %v1730
        %v1769 = vsub.f32 %v1587, %v1734
        %v1770 = vsub.f32 %v1590, %v1734
        %v1771 = vsub.f32 %v1593, %v1738
        %v1772 = vsub.f32 %v1596, %v1738
        %v1773 = vsub.f32 %v1599, %v1742
        %v1774 = vsub.f32 %v1602, %v1742
        %v1775 = vsub.f32 %v1605, %v1746
        %v1776 = vsub.f32 %v1608, %v1746
        %v1777 = vsub.f32 %v1611, %v1750
        %v1778 = vsub.f32 %v1614, %v1750
        %v1779 = vsub.f32 %v1617, %v1754
        %v1780 = vsub.f32 %v1620, %v1754
        %v1781 = vsub.f32 %v1623, %v1758
        %v1782 = vsub.f32 %v1626, %v1758
        %v1783 = vmul.f32 %v1767, 1.442695
        %v1784 = vpow.pop %v1783
        %v1785 = vmul.f32 %v1768, 1.442695
        %v1786 = vpow.pop %v1785
        %v1787 = vmul.f32 %v1769, 1.442695
        %v1788 = vpow.pop %v1787
        %v1789 = vmul.f32 %v1770, 1.442695
        %v1790 = vpow.pop %v1789
        %v1791 = vmul.f32 %v1771, 1.442695
        %v1792 = vpow.pop %v1791
        %v1793 = vmul.f32 %v1772, 1.442695
        %v1794 = vpow.pop %v1793
        %v1795 = vmul.f32 %v1773, 1.442695
        %v1796 = vpow.pop %v1795
        %v1797 = vmul.f32 %v1774, 1.442695
        %v1798 = vpow.pop %v1797
        %v1799 = vmul.f32 %v1775, 1.442695
        %v1800 = vpow.pop %v1799
        %v1801 = vmul.f32 %v1776, 1.442695
        %v1802 = vpow.pop %v1801
        %v1803 = vmul.f32 %v1777, 1.442695
        %v1804 = vpow.pop %v1803
        %v1805 = vmul.f32 %v1778, 1.442695
        %v1806 = vpow.pop %v1805
        %v1807 = vmul.f32 %v1779, 1.442695
        %v1808 = vpow.pop %v1807
        %v1809 = vmul.f32 %v1780, 1.442695
        %v1810 = vpow.pop %v1809
        %v1811 = vmul.f32 %v1781, 1.442695
        %v1812 = vpow.pop %v1811
        %v1813 = vmul.f32 %v1782, 1.442695
        %v1814 = vpow.pop %v1813
        %1831 = vset.pattern.permute.xlu0 0
        %1832 = vperm.xlu0 %1831, %v1784
        %v1833 = vpop.permute.xlu0 %1832
        %1834 = vset.pattern.permute.xlu0 0
        %1835 = vperm.xlu0 %1834, %v1786
        %v1836 = vpop.permute.xlu0 %1835
        %1837 = vset.pattern.permute.xlu0 0
        %1838 = vperm.xlu0 %1837, %v1788
        %v1839 = vpop.permute.xlu0 %1838
        %1840 = vset.pattern.permute.xlu0 0
        %1841 = vperm.xlu0 %1840, %v1790
        %v1842 = vpop.permute.xlu0 %1841
        %1843 = vset.pattern.permute.xlu0 0
        %1844 = vperm.xlu0 %1843, %v1792
        %v1845 = vpop.permute.xlu0 %1844
        %1846 = vset.pattern.permute.xlu0 0
        %1847 = vperm.xlu0 %1846, %v1794
        %v1848 = vpop.permute.xlu0 %1847
        %1849 = vset.pattern.permute.xlu0 0
        %1850 = vperm.xlu0 %1849, %v1796
        %v1851 = vpop.permute.xlu0 %1850
        %1852 = vset.pattern.permute.xlu0 0
        %1853 = vperm.xlu0 %1852, %v1798
        %v1854 = vpop.permute.xlu0 %1853
        %1855 = vset.pattern.permute.xlu0 0
        %1856 = vperm.xlu0 %1855, %v1800
        %v1857 = vpop.permute.xlu0 %1856
        %1858 = vset.pattern.permute.xlu0 0
        %1859 = vperm.xlu0 %1858, %v1802
        %v1860 = vpop.permute.xlu0 %1859
        %1861 = vset.pattern.permute.xlu0 0
        %1862 = vperm.xlu0 %1861, %v1804
        %v1863 = vpop.permute.xlu0 %1862
        %1864 = vset.pattern.permute.xlu0 0
        %1865 = vperm.xlu0 %1864, %v1806
        %v1866 = vpop.permute.xlu0 %1865
        %1867 = vset.pattern.permute.xlu0 0
        %1868 = vperm.xlu0 %1867, %v1808
        %v1869 = vpop.permute.xlu0 %1868
        %1870 = vset.pattern.permute.xlu0 0
        %1871 = vperm.xlu0 %1870, %v1810
        %v1872 = vpop.permute.xlu0 %1871
        %1873 = vset.pattern.permute.xlu0 0
        %1874 = vperm.xlu0 %1873, %v1812
        %v1875 = vpop.permute.xlu0 %1874
        %1876 = vset.pattern.permute.xlu0 0
        %1877 = vperm.xlu0 %1876, %v1814
        %v1878 = vpop.permute.xlu0 %1877
        %v1879 = vlaneseq
        %v1880 = vshrl.u32 %v1879, 7
        %v1881 = vsub.s32 %v827, %v1880
        %v1882 = vrot.slane %v1833, %v1881
        %v1883 = vlaneseq
        %v1884 = vshrl.u32 %v1883, 7
        %v1885 = vsub.s32 %v832, %v1884
        %v1886 = vrot.slane %v1836, %v1885
        %v1887 = vsel %vm837, %v1886, %v1882
        %v1888 = vlaneseq
        %v1889 = vshrl.u32 %v1888, 7
        %v1890 = vsub.s32 %v827, %v1889
        %v1891 = vrot.slane %v1839, %v1890
        %v1892 = vlaneseq
        %v1893 = vshrl.u32 %v1892, 7
        %v1894 = vsub.s32 %v832, %v1893
        %v1895 = vrot.slane %v1842, %v1894
        %v1896 = vsel %vm837, %v1895, %v1891
        %v1897 = vlaneseq
        %v1898 = vshrl.u32 %v1897, 7
        %v1899 = vsub.s32 %v827, %v1898
        %v1900 = vrot.slane %v1845, %v1899
        %v1901 = vlaneseq
        %v1902 = vshrl.u32 %v1901, 7
        %v1903 = vsub.s32 %v832, %v1902
        %v1904 = vrot.slane %v1848, %v1903
        %v1905 = vsel %vm837, %v1904, %v1900
        %v1906 = vlaneseq
        %v1907 = vshrl.u32 %v1906, 7
        %v1908 = vsub.s32 %v827, %v1907
        %v1909 = vrot.slane %v1851, %v1908
        %v1910 = vlaneseq
        %v1911 = vshrl.u32 %v1910, 7
        %v1912 = vsub.s32 %v832, %v1911
        %v1913 = vrot.slane %v1854, %v1912
        %v1914 = vsel %vm837, %v1913, %v1909
        %v1915 = vlaneseq
        %v1916 = vshrl.u32 %v1915, 7
        %v1917 = vsub.s32 %v827, %v1916
        %v1918 = vrot.slane %v1857, %v1917
        %v1919 = vlaneseq
        %v1920 = vshrl.u32 %v1919, 7
        %v1921 = vsub.s32 %v832, %v1920
        %v1922 = vrot.slane %v1860, %v1921
        %v1923 = vsel %vm837, %v1922, %v1918
        %v1924 = vlaneseq
        %v1925 = vshrl.u32 %v1924, 7
        %v1926 = vsub.s32 %v827, %v1925
        %v1927 = vrot.slane %v1863, %v1926
        %v1928 = vlaneseq
        %v1929 = vshrl.u32 %v1928, 7
        %v1930 = vsub.s32 %v832, %v1929
        %v1931 = vrot.slane %v1866, %v1930
        %v1932 = vsel %vm837, %v1931, %v1927
        %v1933 = vlaneseq
        %v1934 = vshrl.u32 %v1933, 7
        %v1935 = vsub.s32 %v827, %v1934
        %v1936 = vrot.slane %v1869, %v1935
        %v1937 = vlaneseq
        %v1938 = vshrl.u32 %v1937, 7
        %v1939 = vsub.s32 %v832, %v1938
        %v1940 = vrot.slane %v1872, %v1939
        %v1941 = vsel %vm837, %v1940, %v1936
        %v1942 = vlaneseq
        %v1943 = vshrl.u32 %v1942, 7
        %v1944 = vsub.s32 %v827, %v1943
        %v1945 = vrot.slane %v1875, %v1944
        %v1946 = vlaneseq
        %v1947 = vshrl.u32 %v1946, 7
        %v1948 = vsub.s32 %v832, %v1947
        %v1949 = vrot.slane %v1878, %v1948
        %v1950 = vsel %vm837, %v1949, %v1945
        %v1951 = vsel %vm902, %v1896, %v1887
        %v1952 = vsel %vm904, %v1905, %v1951
        %v1953 = vsel %vm906, %v1914, %v1952
        %v1954 = vsel %vm908, %v1923, %v1953
        %v1955 = vsel %vm910, %v1932, %v1954
        %v1956 = vsel %vm912, %v1941, %v1955
        %v1957 = vsel %vm914, %v1950, %v1956
        %v1959 = vsel %vm917, %v1957, 0.0
        %1960 = vadd.xlane.f32.xlu0 %v1959
        %v1961 = vpop.xlane.xlu0 %1960
        %v1963 = vlaneseq
        %v1964 = vshrl.u32 %v1963, 7
        %v1965 = vsub.s32 0, %v1964
        %v1966 = vrot.slane %v1961, %v1965
        %v1967 = vlaneseq
        %v1968 = vshrl.u32 %v1967, 7
        %v1969 = vsub.s32 1, %v1968
        %v1970 = vrot.slane %v1961, %v1969
        %v1971 = vlaneseq
        %v1972 = vshrl.u32 %v1971, 7
        %v1973 = vsub.s32 2, %v1972
        %v1974 = vrot.slane %v1961, %v1973
        %v1975 = vlaneseq
        %v1976 = vshrl.u32 %v1975, 7
        %v1977 = vsub.s32 3, %v1976
        %v1978 = vrot.slane %v1961, %v1977
        %v1979 = vlaneseq
        %v1980 = vshrl.u32 %v1979, 7
        %v1981 = vsub.s32 4, %v1980
        %v1982 = vrot.slane %v1961, %v1981
        %v1983 = vlaneseq
        %v1984 = vshrl.u32 %v1983, 7
        %v1985 = vsub.s32 5, %v1984
        %v1986 = vrot.slane %v1961, %v1985
        %v1987 = vlaneseq
        %v1988 = vshrl.u32 %v1987, 7
        %v1989 = vsub.s32 6, %v1988
        %v1990 = vrot.slane %v1961, %v1989
        %v1991 = vlaneseq
        %v1992 = vshrl.u32 %v1991, 7
        %v1993 = vsub.s32 7, %v1992
        %v1994 = vrot.slane %v1961, %v1993
        %v2003 = vrcp.pop %v1966
        %v2004 = vmul.f32 %v1784, %v2003
        %v2005 = vmul.f32 %v1786, %v2003
        %v2006 = vrcp.pop %v1970
        %v2007 = vmul.f32 %v1788, %v2006
        %v2008 = vmul.f32 %v1790, %v2006
        %v2009 = vrcp.pop %v1974
        %v2010 = vmul.f32 %v1792, %v2009
        %v2011 = vmul.f32 %v1794, %v2009
        %v2012 = vrcp.pop %v1978
        %v2013 = vmul.f32 %v1796, %v2012
        %v2014 = vmul.f32 %v1798, %v2012
        %v2015 = vrcp.pop %v1982
        %v2016 = vmul.f32 %v1800, %v2015
        %v2017 = vmul.f32 %v1802, %v2015
        %v2018 = vrcp.pop %v1986
        %v2019 = vmul.f32 %v1804, %v2018
        %v2020 = vmul.f32 %v1806, %v2018
        %v2021 = vrcp.pop %v1990
        %v2022 = vmul.f32 %v1808, %v2021
        %v2023 = vmul.f32 %v1810, %v2021
        %v2024 = vrcp.pop %v1994
        %v2025 = vmul.f32 %v1812, %v2024
        %v2026 = vmul.f32 %v1814, %v2024
        %2043 = vset.pattern.permute.xlu0 0
        %2044 = vperm.xlu0 %2043, %v2004
        %v2045 = vpop.permute.xlu0 %2044
        %2046 = vset.pattern.permute.xlu0 0
        %2047 = vperm.xlu0 %2046, %v2005
        %v2048 = vpop.permute.xlu0 %2047
        %2049 = vset.pattern.permute.xlu0 0
        %2050 = vperm.xlu0 %2049, %v2007
        %v2051 = vpop.permute.xlu0 %2050
        %2052 = vset.pattern.permute.xlu0 0
        %2053 = vperm.xlu0 %2052, %v2008
        %v2054 = vpop.permute.xlu0 %2053
        %2055 = vset.pattern.permute.xlu0 0
        %2056 = vperm.xlu0 %2055, %v2010
        %v2057 = vpop.permute.xlu0 %2056
        %2058 = vset.pattern.permute.xlu0 0
        %2059 = vperm.xlu0 %2058, %v2011
        %v2060 = vpop.permute.xlu0 %2059
        %2061 = vset.pattern.permute.xlu0 0
        %2062 = vperm.xlu0 %2061, %v2013
        %v2063 = vpop.permute.xlu0 %2062
        %2064 = vset.pattern.permute.xlu0 0
        %2065 = vperm.xlu0 %2064, %v2014
        %v2066 = vpop.permute.xlu0 %2065
        %2067 = vset.pattern.permute.xlu0 0
        %2068 = vperm.xlu0 %2067, %v2016
        %v2069 = vpop.permute.xlu0 %2068
        %2070 = vset.pattern.permute.xlu0 0
        %2071 = vperm.xlu0 %2070, %v2017
        %v2072 = vpop.permute.xlu0 %2071
        %2073 = vset.pattern.permute.xlu0 0
        %2074 = vperm.xlu0 %2073, %v2019
        %v2075 = vpop.permute.xlu0 %2074
        %2076 = vset.pattern.permute.xlu0 0
        %2077 = vperm.xlu0 %2076, %v2020
        %v2078 = vpop.permute.xlu0 %2077
        %2079 = vset.pattern.permute.xlu0 0
        %2080 = vperm.xlu0 %2079, %v2022
        %v2081 = vpop.permute.xlu0 %2080
        %2082 = vset.pattern.permute.xlu0 0
        %2083 = vperm.xlu0 %2082, %v2023
        %v2084 = vpop.permute.xlu0 %2083
        %2085 = vset.pattern.permute.xlu0 0
        %2086 = vperm.xlu0 %2085, %v2025
        %v2087 = vpop.permute.xlu0 %2086
        %2088 = vset.pattern.permute.xlu0 0
        %2089 = vperm.xlu0 %2088, %v2026
        %v2090 = vpop.permute.xlu0 %2089
        %v2091 = vlaneseq
        %v2092 = vshrl.u32 %v2091, 7
        %v2093 = vsub.s32 %v827, %v2092
        %v2094 = vrot.slane %v2045, %v2093
        %v2095 = vlaneseq
        %v2096 = vshrl.u32 %v2095, 7
        %v2097 = vsub.s32 %v832, %v2096
        %v2098 = vrot.slane %v2048, %v2097
        %v2099 = vsel %vm837, %v2098, %v2094
        %v2100 = vlaneseq
        %v2101 = vshrl.u32 %v2100, 7
        %v2102 = vsub.s32 %v827, %v2101
        %v2103 = vrot.slane %v2051, %v2102
        %v2104 = vlaneseq
        %v2105 = vshrl.u32 %v2104, 7
        %v2106 = vsub.s32 %v832, %v2105
        %v2107 = vrot.slane %v2054, %v2106
        %v2108 = vsel %vm837, %v2107, %v2103
        %v2109 = vlaneseq
        %v2110 = vshrl.u32 %v2109, 7
        %v2111 = vsub.s32 %v827, %v2110
        %v2112 = vrot.slane %v2057, %v2111
        %v2113 = vlaneseq
        %v2114 = vshrl.u32 %v2113, 7
        %v2115 = vsub.s32 %v832, %v2114
        %v2116 = vrot.slane %v2060, %v2115
        %v2117 = vsel %vm837, %v2116, %v2112
        %v2118 = vlaneseq
        %v2119 = vshrl.u32 %v2118, 7
        %v2120 = vsub.s32 %v827, %v2119
        %v2121 = vrot.slane %v2063, %v2120
        %v2122 = vlaneseq
        %v2123 = vshrl.u32 %v2122, 7
        %v2124 = vsub.s32 %v832, %v2123
        %v2125 = vrot.slane %v2066, %v2124
        %v2126 = vsel %vm837, %v2125, %v2121
        %v2127 = vlaneseq
        %v2128 = vshrl.u32 %v2127, 7
        %v2129 = vsub.s32 %v827, %v2128
        %v2130 = vrot.slane %v2069, %v2129
        %v2131 = vlaneseq
        %v2132 = vshrl.u32 %v2131, 7
        %v2133 = vsub.s32 %v832, %v2132
        %v2134 = vrot.slane %v2072, %v2133
        %v2135 = vsel %vm837, %v2134, %v2130
        %v2136 = vlaneseq
        %v2137 = vshrl.u32 %v2136, 7
        %v2138 = vsub.s32 %v827, %v2137
        %v2139 = vrot.slane %v2075, %v2138
        %v2140 = vlaneseq
        %v2141 = vshrl.u32 %v2140, 7
        %v2142 = vsub.s32 %v832, %v2141
        %v2143 = vrot.slane %v2078, %v2142
        %v2144 = vsel %vm837, %v2143, %v2139
        %v2145 = vlaneseq
        %v2146 = vshrl.u32 %v2145, 7
        %v2147 = vsub.s32 %v827, %v2146
        %v2148 = vrot.slane %v2081, %v2147
        %v2149 = vlaneseq
        %v2150 = vshrl.u32 %v2149, 7
        %v2151 = vsub.s32 %v832, %v2150
        %v2152 = vrot.slane %v2084, %v2151
        %v2153 = vsel %vm837, %v2152, %v2148
        %v2154 = vlaneseq
        %v2155 = vshrl.u32 %v2154, 7
        %v2156 = vsub.s32 %v827, %v2155
        %v2157 = vrot.slane %v2087, %v2156
        %v2158 = vlaneseq
        %v2159 = vshrl.u32 %v2158, 7
        %v2160 = vsub.s32 %v832, %v2159
        %v2161 = vrot.slane %v2090, %v2160
        %v2162 = vsel %vm837, %v2161, %v2157
        %v2163 = vsel %vm902, %v2108, %v2099
        %v2164 = vsel %vm904, %v2117, %v2163
        %v2165 = vsel %vm906, %v2126, %v2164
        %v2166 = vsel %vm908, %v2135, %v2165
        %v2167 = vsel %vm910, %v2144, %v2166
        %v2168 = vsel %vm912, %v2153, %v2167
        %v2169 = vsel %vm914, %v2162, %v2168
        %v2170 = vsel %vm917, %v2169, 0
        %2172 = vmatprep.subr.mxu0 0.0
        %2173 = vmatpush1.msra.mxu0 0.0
        %2174 = vmatprep.subr.mxu0 0.0
        %2175 = vmatpush1.msra.mxu0 0.0
        %2176 = vmatprep.subr.mxu0 0.0
        %2177 = vmatpush1.msra.mxu0 0.0
        %2178 = vmatprep.subr.mxu0 0.0
        %2179 = vmatpush1.msra.mxu0 0.0
        %2180 = vmatprep.subr.mxu0 0.0
        %2181 = vmatpush1.msra.mxu0 0.0
        %2182 = vmatprep.subr.mxu0 0.0
        %2183 = vmatpush1.msra.mxu0 0.0
        %2184 = vmatprep.subr.mxu0 0.0
        %2185 = vmatpush1.msra.mxu0 0.0
        %2186 = vmatprep.subr.mxu0 0.0
        %2187 = vmatpush1.msra.mxu0 0.0
        %2188 = vmatprep.subr.mxu0 0.0
        %2189 = vmatpush1.msra.mxu0 0.0
        %2190 = vmatprep.subr.mxu0 0.0
        %2191 = vmatpush1.msra.mxu0 0.0
        %2192 = vmatprep.subr.mxu0 0.0
        %2193 = vmatpush1.msra.mxu0 0.0
        %2194 = vmatprep.subr.mxu0 0.0
        %2195 = vmatpush1.msra.mxu0 0.0
        %2196 = vmatprep.subr.mxu0 0.0
        %2197 = vmatpush1.msra.mxu0 0.0
        %2198 = vmatprep.subr.mxu0 0.0
        %2199 = vmatpush1.msra.mxu0 0.0
        %2200 = vmatprep.subr.mxu0 0.0
        %2201 = vmatpush1.msra.mxu0 %v422
        %2202 = vmatprep.subr.mxu0 0.0
        %2203 = vmatpush1.msra.mxu0 %v421
        %2204 = vmatprep.subr.mxu0 0.0
        %2205 = vmatpush2.msra.mxu0 0.0
        %2206 = vmatprep.subr.mxu0 0.0
        %2207 = vmatpush2.msra.mxu0 0.0
        %2208 = vmatprep.subr.mxu0 0.0
        %2209 = vmatpush2.msra.mxu0 0.0
        %2210 = vmatprep.subr.mxu0 0.0
        %2211 = vmatpush2.msra.mxu0 0.0
        %2212 = vmatprep.subr.mxu0 0.0
        %2213 = vmatpush2.msra.mxu0 0.0
        %2214 = vmatprep.subr.mxu0 0.0
        %2215 = vmatpush2.msra.mxu0 0.0
        %2216 = vmatprep.subr.mxu0 0.0
        %2217 = vmatpush2.msra.mxu0 0.0
        %2218 = vmatprep.subr.mxu0 0.0
        %2219 = vmatpush2.msra.mxu0 0.0
        %2220 = vmatprep.subr.mxu0 0.0
        %2221 = vmatpush2.msra.mxu0 0.0
        %2222 = vmatprep.subr.mxu0 0.0
        %2223 = vmatpush2.msra.mxu0 0.0
        %2224 = vmatprep.subr.mxu0 0.0
        %2225 = vmatpush2.msra.mxu0 0.0
        %2226 = vmatprep.subr.mxu0 0.0
        %2227 = vmatpush2.msra.mxu0 0.0
        %2228 = vmatprep.subr.mxu0 0.0
        %2229 = vmatpush2.msra.mxu0 0.0
        %2230 = vmatprep.subr.mxu0 0.0
        %2231 = vmatpush2.msra.mxu0 0.0
        %2232 = vmatprep.subr.mxu0 0.0
        %2233 = vmatpush2.msra.mxu0 0.0
        %2234 = vmatprep.subr.mxu0 0.0
        %2235 = vmatpush2.msra.mxu0 0.0
        %2236 = vmatprep.mubr.f32.mxu0 0.0
        %2237 = vmatmul.mubr.f32.gmra.mxu0 %v2170
        %v2238 = vpop.f32.mrf.mxu0
        %v2239 = vadd.f32 0.0, %v2238
        %v2240 = vpop.f32.mrf.mxu0
        %2241 = vdwg.mxu0
        %s2242 = scalar_lea.vmem %s397, 8 [#allocation10]
        %2243 = vst.msk [vmem:[%s2242] sm:$0xff] %vm439, %v2239
        %s2245 = scalar_lea.vmem %s404, 8 [#allocation11]
        %2246 = vst.msk [vmem:[%s2245] sm:$0xff] %vm917, %v2169
        %s2247 = scalar_lea.vmem %s411, 8 [#allocation13]
        %2248 = vst.msk [vmem:[%s2247] sm:$0xff] %vm917, %v1721
        %s2249 = sand.u32 %s177, 1
        %s2250 = scalar_lea.sflag [#allocation4], %s2249
        %s2251 = sand.u32 %s177, 1
        %s2252 = smul.addr %s2251, 16
        %s2253 = scalar_lea.vmem [#allocation10], %s2252
        %s2254 = sand.u32 %s33, 1
        %s2255 = scalar_lea.sflag [#allocation12], %s2254
        %s2256 = sand.u32 %s203, 1
        %s2257 = smul.addr %s2256, 16
        %s2258 = scalar_lea.vmem [#allocation11], %s2257
        %s2259 = sand.u32 %s33, 1
        %s2260 = scalar_lea.sflag [#allocation12], %s2259
        %s2261 = sand.u32 %s229, 1
        %s2262 = smul.addr %s2261, 16
        %s2263 = scalar_lea.vmem [#allocation13], %s2262
        // Predicated region
        $region61: #{tpu_custom_call.1} parent=43 // pred_check
          %p2264 = pneg %p187
        $region62: #{tpu_custom_call.1} parent=43 // pred_check_branch
          %2266 = sbr.rel (%p2264) target = $region64
        $region63: #{tpu_custom_call.1} parent=43 // pred_region
          %s2267 = smul.u32 2, %s33
          %s2269 = ssub.s32 256, 256
          %2270 = vsyncadd %s2250, %s2269
          %s2271 = smul.addr %s2267, 128
          %s2272 = scalar_lea.hbm %s6, %s2271
          %s2273 = sshll.u32 %s2253, 4
          %s2274 = int_to_ptr.vmem [resolvable:$true] %s2273
          %2279 = dma.vmem_to_hbm [thread:$0]  %s2274, 256, %s2272, %s2250, 128, 128, 8
        $region64: #{tpu_custom_call.1} parent=43 // pred_fallthru
          _
        // Predicated region
        $region65: #{tpu_custom_call.1} parent=43 // pred_check
          %p2280 = pneg %p213
        $region66: #{tpu_custom_call.1} parent=43 // pred_check_branch
          %2282 = sbr.rel (%p2280) target = $region68
        $region67: #{tpu_custom_call.1} parent=43 // pred_region
          %s2283 = smul.u32 2, %s33
          %s2285 = ssub.s32 256, 256
          %2286 = vsyncadd %s2255, %s2285
          %s2287 = smul.addr %s2283, 128
          %s2288 = scalar_lea.hbm %s7, %s2287
          %s2289 = sshll.u32 %s2258, 4
          %s2290 = int_to_ptr.vmem [resolvable:$true] %s2289
          %2295 = dma.vmem_to_hbm [thread:$0]  %s2290, 256, %s2288, %s2255, 128, 128, 8
        $region68: #{tpu_custom_call.1} parent=43 // pred_fallthru
          _
        // Predicated region
        $region69: #{tpu_custom_call.1} parent=43 // pred_check
          %p2296 = pneg %p239
        $region70: #{tpu_custom_call.1} parent=43 // pred_check_branch
          %2298 = sbr.rel (%p2296) target = $region72
        $region71: #{tpu_custom_call.1} parent=43 // pred_region
          %s2299 = smul.u32 2, %s33
          %s2301 = ssub.s32 256, 256
          %2302 = vsyncadd %s2260, %s2301
          %s2303 = smul.addr %s2299, 128
          %s2304 = scalar_lea.hbm %s8, %s2303
          %s2305 = sshll.u32 %s2263, 4
          %s2306 = int_to_ptr.vmem [resolvable:$true] %s2305
          %2311 = dma.vmem_to_hbm [thread:$0]  %s2306, 256, %s2304, %s2260, 128, 128, 8
        $region72: #{tpu_custom_call.1} parent=43 // pred_fallthru
          _
      $region44: #{tpu_custom_call.1} parent=5 // pred_fallthru
        _
      %p2312 = scmp.le.s32.totalorder 2, %s28
      // Predicated region
      $region73: #{tpu_custom_call.1} parent=5 // pred_check
        %p2313 = pneg %p2312
      $region74: #{tpu_custom_call.1} parent=5 // pred_check_branch
        %2315 = sbr.rel (%p2313) target = $region76
      $region75: #{tpu_custom_call.1} parent=5 // pred_region
        %s2316 = ssub.s32 %s28, 2
        // Predicated region
        $region77: #{tpu_custom_call.1} parent=75 // pred_check
          %p2317 = pneg %p193
        $region78: #{tpu_custom_call.1} parent=75 // pred_check_branch
          %2319 = sbr.rel (%p2317) target = $region80
        $region79: #{tpu_custom_call.1} parent=75 // pred_region
          %s2320 = sand.u32 %s178, 1
          %s2321 = scalar_lea.sflag [#allocation4], %s2320
          %s2322 = sand.u32 %s178, 1
          %s2323 = smul.addr %s2322, 16
          %s2324 = scalar_lea.vmem [#allocation10], %s2323
          %2325 = dma.done %s2321, 256
        $region80: #{tpu_custom_call.1} parent=75 // pred_fallthru
          _
        // Predicated region
        $region81: #{tpu_custom_call.1} parent=75 // pred_check
          %p2326 = pneg %p219
        $region82: #{tpu_custom_call.1} parent=75 // pred_check_branch
          %2328 = sbr.rel (%p2326) target = $region84
        $region83: #{tpu_custom_call.1} parent=75 // pred_region
          %s2329 = sand.u32 %s34, 1
          %s2330 = scalar_lea.sflag [#allocation12], %s2329
          %s2331 = sand.u32 %s204, 1
          %s2332 = smul.addr %s2331, 16
          %s2333 = scalar_lea.vmem [#allocation11], %s2332
          %2334 = dma.done %s2330, 256
        $region84: #{tpu_custom_call.1} parent=75 // pred_fallthru
          _
        // Predicated region
        $region85: #{tpu_custom_call.1} parent=75 // pred_check
          %p2335 = pneg %p245
        $region86: #{tpu_custom_call.1} parent=75 // pred_check_branch
          %2337 = sbr.rel (%p2335) target = $region88
        $region87: #{tpu_custom_call.1} parent=75 // pred_region
          %s2338 = sand.u32 %s34, 1
          %s2339 = scalar_lea.sflag [#allocation12], %s2338
          %s2340 = sand.u32 %s230, 1
          %s2341 = smul.addr %s2340, 16
          %s2342 = scalar_lea.vmem [#allocation13], %s2341
          %2343 = dma.done %s2339, 256
        $region88: #{tpu_custom_call.1} parent=75 // pred_fallthru
          _
      $region76: #{tpu_custom_call.1} parent=5 // pred_fallthru
        _
    $region6: #{tpu_custom_call.1} parent=1 // loop_footer
      %s32 = sadd.s32 1, %s28
    $region7: #{tpu_custom_call.1} parent=1 // loop_footer_branch
      %27 = sbr.rel target = $region3
    $region8: #{tpu_custom_call.1} parent=1 // loop_exit
      _
    %2344 = vsyncpa [#allocation3], 1
    %s2345 = scalar_lea.sflag [#allocation3], 1
    %2346 = vsyncpa %s2345, 1
    %2347 = vsyncpa [#allocation6], 1
    %s2348 = scalar_lea.sflag [#allocation6], 1
    %2349 = vsyncpa %s2348, 1
    %2350 = vsyncpa [#allocation9], 1
    %2351 = vsyncpa [#allocation4], 1
    %s2352 = scalar_lea.sflag [#allocation4], 1
    %2353 = vsyncpa %s2352, 1
    %2354 = vsyncpa [#allocation12], 1
    %s2355 = scalar_lea.sflag [#allocation12], 1
    %2356 = vsyncpa %s2355, 1

</llo_original>
